<compile_context>
chip_gen: v7x
topology: tpu7x:2x2x1
jax: 0.10.0
libtpu: 0.0.40
codegen_flags: <defaults>
</compile_context>

<pallas_src>
import functools

import jax
import jax.numpy as jnp
from jax.experimental import pallas as pl
from jax.experimental.pallas import tpu as pltpu

_LANE = 128
_SUBLANE = 8


def _round_up(a, b):
    return (a + b - 1) // b * b


def _cdiv(a, b):
    return (a + b - 1) // b


def _device_kind():
    try:
        return jax.devices()[0].device_kind.lower()
    except Exception:
        return ""


def _vmem_capacity_bytes():
    """Generation-aware VMEM capacity (v5e/v6e: 128 MiB, v7x: 64 MiB)."""
    try:
        cap = getattr(pltpu.get_tpu_info(), "vmem_capacity_bytes", None)
        if cap:
            return int(cap)
    except Exception:
        pass
    return 64 * 1024 * 1024  # conservative (v7x-sized) fallback


def _sublane_multiple(itemsize):
    # f32/int32: 8, bf16/f16: 16, int8/fp8: 32 -> native packed tiles, no
    # sub-tile relayout / masked stores on the dominant output stream.
    return _SUBLANE * max(1, 4 // max(1, int(itemsize)))


def _lane_cap(compute_itemsize):
    """Generation/dtype-aware cap on the input lane tile TT.

    Keeps the one-hot replication matmul under the per-generation MXU-vs-HBM
    roofline so the kernel stays bandwidth bound:
      f32 compute (MXU bf16-emulated): v5e -> 128, v6e/v7x -> 256
      bf16 compute:                    v5e -> 256, v6e/v7x -> 512
    """
    kind = _device_kind()
    is_v5 = "v5" in kind
    if compute_itemsize >= 4:
        return 128 if is_v5 else 256
    return 256 if is_v5 else 512


def _choose_tiles(R, T, s, orig_itemsize, compute_itemsize):
    cap = _vmem_capacity_bytes()
    # Per-step working set target (input+output, double-buffered).  32 MiB fits
    # comfortably under v7x's 64 MiB VMEM and cuts grid-step count vs cap//4.
    budget = min(cap // 2, 32 * 1024 * 1024)

    lane_cap = _lane_cap(compute_itemsize)
    TT = T if T <= lane_cap else lane_cap  # full-extent block OR 128-multiple

    sub = _sublane_multiple(orig_itemsize)

    in_lanes = _round_up(TT, _LANE)
    out_lanes = _round_up(TT * s, _LANE)
    per_row = 2 * (in_lanes + out_lanes) * orig_itemsize  # in + out, double-buffered
    rep_bytes = _round_up(TT, _SUBLANE) * out_lanes * compute_itemsize

    tr = (budget - 2 * rep_bytes) // per_row
    tr = max(sub, min(int(tr), 8192))
    if tr >= R:
        TR = R
    else:
        TR = max(sub, (tr // sub) * sub)

    # Ensure enough parallel blocks for both v7x TensorCores and a non-degenerate
    # pipeline: split the row axis when the grid would otherwise be tiny.
    gt = _cdiv(T, TT)
    if _cdiv(R, TR) * gt < 4 and R > sub:
        rows_wanted = max(1, min(_cdiv(R, sub), _cdiv(4, gt)))
        TR = max(sub, _round_up(_cdiv(R, rows_wanted), sub))

    used = TR * per_row + 2 * rep_bytes
    vmem_limit = int(min(cap * 3 // 4, max(used + (8 << 20), 24 << 20)))
    return TR, TT, vmem_limit


def _upsample_kernel(x_ref, rep_ref, o_ref, *, T, TT, compute_dtype, mask_tail):
    rep = rep_ref[...]

    def emit(x_tile):
        acc = jax.lax.dot(
            x_tile.astype(compute_dtype), rep,
            preferred_element_type=jnp.float32)
        o_ref[...] = acc.astype(o_ref.dtype)

    if mask_tail:
        # Only the last lane-block can contain padded garbage (possibly NaN/Inf)
        # that would leak through 0*NaN in the dot; interior blocks take the
        # unmasked fast path.
        j = pl.program_id(1)
        last = pl.num_programs(1) - 1

        @pl.when(j != last)
        def _():
            emit(x_ref[...])

        @pl.when(j == last)
        def _():
            x = x_ref[...]
            lane = jax.lax.broadcasted_iota(jnp.int32, x.shape, 1)
            valid = (j * TT + lane) < T
            emit(jnp.where(valid, x, jnp.zeros_like(x)))
    else:
        emit(x_ref[...])


def upsample_nearest_1d(x, scale_factor=2):
    """Nearest-neighbor upsample along the last axis (== F.interpolate, mode='nearest')."""
    s = int(scale_factor)
    assert s >= 1 and s == scale_factor, "only integer scale_factor supported"
    # TODO(synk): non-integer scale factors of F.interpolate are not implemented.

    *lead, T = x.shape
    if s == 1:
        return x  # identity — no kernel launch

    out_T = T * s
    if T == 0 or out_T < _LANE:
        # Sub-128-lane outputs -> masked partial stores; XLA is at least as fast.
        return jnp.repeat(x, s, axis=-1)

    R = 1
    for d in lead:
        R *= d

    orig_dtype = x.dtype
    if orig_dtype == jnp.bfloat16 or orig_dtype == jnp.float32:
        compute_dtype = orig_dtype
    else:
        compute_dtype = jnp.float32  # TODO(synk): exact only for |ints| < 2**24
    orig_itemsize = jnp.dtype(orig_dtype).itemsize
    compute_itemsize = jnp.dtype(compute_dtype).itemsize

    x2 = x.reshape(R, T)  # leading-dim merge: free, layout-preserving

    TR, TT, vmem_limit = _choose_tiles(R, T, s, orig_itemsize, compute_itemsize)
    mask_tail = (T % TT) != 0

    # One-hot replication matrix: REP[t, l] = 1 iff l // s == t (block-uniform).
    t_idx = jnp.arange(TT, dtype=jnp.int32)[:, None]
    l_idx = jnp.arange(TT * s, dtype=jnp.int32)[None, :]
    rep = (l_idx // s == t_idx).astype(compute_dtype)

    grid = (pl.cdiv(R, TR), pl.cdiv(T, TT))
    kernel = functools.partial(_upsample_kernel, T=T, TT=TT,
                               compute_dtype=compute_dtype, mask_tail=mask_tail)

    cost = pl.CostEstimate(
        flops=int(2 * R * T * TT * s),
        transcendentals=0,
        bytes_accessed=int(R * T * (1 + s) * orig_itemsize
                           + TT * TT * s * compute_itemsize),
    )

    def build(rep_spec):
        return pl.pallas_call(
            kernel,
            out_shape=jax.ShapeDtypeStruct((R, out_T), orig_dtype),
            grid=grid,
            in_specs=[
                pl.BlockSpec((TR, TT), lambda i, j: (i, j)),
                rep_spec,  # constant block index -> DMA'd once, VMEM-resident
            ],
            out_specs=pl.BlockSpec((TR, TT * s), lambda i, j: (i, j)),
            compiler_params=pltpu.CompilerParams(
                dimension_semantics=("parallel", "parallel"),
                vmem_limit_bytes=vmem_limit,
            ),
            cost_estimate=cost,
        )

    try:
        # Single-buffer the constant REP block (double-buffering it only wastes VMEM).
        out2 = build(pl.BlockSpec((TT, TT * s), lambda i, j: (0, 0),
                                  pipeline_mode=pl.Buffered(1)))(x2, rep)
    except Exception:
        # Fall back to the default (double-buffered) pipeline mode.
        out2 = build(pl.BlockSpec((TT, TT * s), lambda i, j: (0, 0)))(x2, rep)

    return out2.reshape(*lead, out_T)  # trailing split: free


if __name__ == "__main__":
    key = jax.random.PRNGKey(0)
    scale_factor = 2

    # Small shape consistent with the 1-D module: (batch, channels, time).
    # (T*s < 128 -> exercises the XLA short-circuit path.)
    N, C, T = 2, 4, 16
    x = jax.random.normal(key, (N, C, T), dtype=jnp.float32)
    out = jax.block_until_ready(upsample_nearest_1d(x, scale_factor))
    ref = jnp.repeat(x, scale_factor, axis=-1)  # == F.interpolate(x, scale_factor=2)
    assert out.shape == (N, C, T * scale_factor)
    assert jnp.allclose(out, ref, atol=1e-6, rtol=0.0), "mismatch vs reference (tiny)"

    # Larger ragged time axis: multi-block grid + masked edge block, f32 kernel path.
    x2 = jax.random.normal(jax.random.PRNGKey(1), (2, 8, 600), dtype=jnp.float32)
    out2 = jax.block_until_ready(upsample_nearest_1d(x2, scale_factor))
    ref2 = jnp.repeat(x2, scale_factor, axis=-1)
    assert out2.shape == (2, 8, 1200)
    assert jnp.allclose(out2, ref2, atol=1e-6, rtol=0.0), "mismatch vs reference (ragged)"

    # bf16 path (in-kernel bf16 matmul, exact for one-hot REP).
    x3 = jax.random.normal(jax.random.PRNGKey(2), (2, 4, 256), dtype=jnp.bfloat16)
    out3 = jax.block_until_ready(upsample_nearest_1d(x3, scale_factor))
    ref3 = jnp.repeat(x3, scale_factor, axis=-1)
    assert out3.shape == (2, 4, 512)
    assert jnp.array_equal(out3, ref3), "mismatch vs reference (bf16)"

    # int32 path (in-kernel cast to f32 compute and back; no wrapper HBM passes).
    x4 = jax.random.randint(jax.random.PRNGKey(3), (2, 4, 300), 0, 100, dtype=jnp.int32)
    out4 = jax.block_until_ready(upsample_nearest_1d(x4, scale_factor))
    ref4 = jnp.repeat(x4, scale_factor, axis=-1)
    assert out4.shape == (2, 4, 600)
    assert jnp.array_equal(out4, ref4), "mismatch vs reference (int32)"

    print("KERNEL_OK")
</pallas_src>

<mosaic_0001>
module attributes {stable_mosaic.version = 11 : i64} {
  func.func @_upsample_kernel(%arg0: i32, %arg1: i32, %arg2: memref<8x256xf32, #tpu.memory_space<vmem>>, %arg3: memref<256x512xf32, #tpu.memory_space<vmem>>, %arg4: memref<8x512xf32, #tpu.memory_space<vmem>>) attributes {dimension_semantics = [#tpu.dimension_semantics<parallel>, #tpu.dimension_semantics<parallel>], iteration_bounds = array<i64: 2, 3>, scalar_prefetch = 0 : i64, scratch_operands = 0 : i64, tpu.core_type = #tpu.core_type<tc>, window_params = [{transform_indices = @transform_0, window_bounds = array<i64: 8, 256>}, {pipeline_mode = #tpu.pipeline_mode<synchronous>, transform_indices = @transform_1, window_bounds = array<i64: 256, 512>}, {transform_indices = @transform_2, window_bounds = array<i64: 8, 512>}]} {
    %c0 = arith.constant 0 : index
    %c0_0 = arith.constant 0 : index
    %0 = vector.load %arg3[%c0, %c0_0] : memref<256x512xf32, #tpu.memory_space<vmem>>, vector<256x512xf32>
    %c2_i32 = arith.constant 2 : i32
    %1 = arith.cmpi ne, %arg1, %c2_i32 : i32
    %2 = arith.extui %1 : i1 to i32
    %c0_i32 = arith.constant 0 : i32
    %3 = arith.cmpi ne, %2, %c0_i32 : i32
    scf.if %3 {
      %c0_3 = arith.constant 0 : index
      %c0_4 = arith.constant 0 : index
      %7 = vector.load %arg2[%c0_3, %c0_4] : memref<8x256xf32, #tpu.memory_space<vmem>>, vector<8x256xf32>
      %cst = arith.constant dense<0.000000e+00> : vector<8x512xf32>
      %8 = tpu.matmul %7, %0, %cst {dimension_numbers = #tpu.dot_dimension_numbers<[1], [0], [0], [1], [0, 0, 1, 1], [], []>} : vector<8x256xf32>, vector<256x512xf32>, vector<8x512xf32> -> vector<8x512xf32>
      %c0_5 = arith.constant 0 : index
      %c0_6 = arith.constant 0 : index
      %9 = vector.load %arg4[%c0_5, %c0_6] : memref<8x512xf32, #tpu.memory_space<vmem>>, vector<8x512xf32>
      tpu.vector_store %arg4[%c0_5, %c0_6], %8 {strides = array<i32>} : memref<8x512xf32, #tpu.memory_space<vmem>>, vector<8x512xf32>,
    } else {
    }
    %c2_i32_1 = arith.constant 2 : i32
    %4 = arith.cmpi eq, %arg1, %c2_i32_1 : i32
    %5 = arith.extui %4 : i1 to i32
    %c0_i32_2 = arith.constant 0 : i32
    %6 = arith.cmpi ne, %5, %c0_i32_2 : i32
    scf.if %6 {
      %c0_3 = arith.constant 0 : index
      %c0_4 = arith.constant 0 : index
      %7 = vector.load %arg2[%c0_3, %c0_4] : memref<8x256xf32, #tpu.memory_space<vmem>>, vector<8x256xf32>
      %8 = tpu.iota {dimensions = array<i32: 1>} : vector<8x256xi32>
      %c256_i32 = arith.constant 256 : i32
      %9 = arith.muli %arg1, %c256_i32 : i32
      %10 = vector.broadcast %9 : i32 to vector<8x256xi32>
      %11 = arith.addi %10, %8 : vector<8x256xi32>
      %c600_i32 = arith.constant 600 : i32
      %12 = vector.broadcast %c600_i32 : i32 to vector<8x256xi32>
      %13 = arith.cmpi slt, %11, %12 : vector<8x256xi32>
      %cst = arith.constant 0.000000e+00 : f32
      %14 = vector.broadcast %cst : f32 to vector<8x256xf32>
      %15 = arith.select %13, %7, %14 : vector<8x256xi1>, vector<8x256xf32>
      %cst_5 = arith.constant dense<0.000000e+00> : vector<8x512xf32>
      %16 = tpu.matmul %15, %0, %cst_5 {dimension_numbers = #tpu.dot_dimension_numbers<[1], [0], [0], [1], [0, 0, 1, 1], [], []>} : vector<8x256xf32>, vector<256x512xf32>, vector<8x512xf32> -> vector<8x512xf32>
      %c0_6 = arith.constant 0 : index
      %c0_7 = arith.constant 0 : index
      %17 = vector.load %arg4[%c0_6, %c0_7] : memref<8x512xf32, #tpu.memory_space<vmem>>, vector<8x512xf32>
      tpu.vector_store %arg4[%c0_6, %c0_7], %16 {strides = array<i32>} : memref<8x512xf32, #tpu.memory_space<vmem>>, vector<8x512xf32>,
    } else {
    }
    return
  }
  func.func @transform_0(%arg0: i32, %arg1: i32) -> (i32, i32) {
    %c0_i32 = arith.constant 0 : i32
    return %arg0, %arg1 : i32, i32
  }
  func.func @transform_1(%arg0: i32, %arg1: i32) -> (i32, i32) {
    %c0_i32 = arith.constant 0 : i32
    %c0_i32_0 = arith.constant 0 : i32
    %c0_i32_1 = arith.constant 0 : i32
    return %c0_i32, %c0_i32_0 : i32, i32
  }
  func.func @transform_2(%arg0: i32, %arg1: i32) -> (i32, i32) {
    %c0_i32 = arith.constant 0 : i32
    return %arg0, %arg1 : i32, i32
  }
}

module attributes {stable_mosaic.version = 11 : i64} {
  func.func @_upsample_kernel(%arg0: i32, %arg1: i32, %arg2: memref<8x256xf32, #tpu.memory_space<vmem>>, %arg3: memref<256x512xf32, #tpu.memory_space<vmem>>, %arg4: memref<8x512xf32, #tpu.memory_space<vmem>>) attributes {dimension_semantics = [#tpu.dimension_semantics<parallel>, #tpu.dimension_semantics<parallel>], iteration_bounds = array<i64: 2, 3>, scalar_prefetch = 0 : i64, scratch_operands = 0 : i64, tpu.core_type = #tpu.core_type<tc>, window_params = [{transform_indices = @transform_0, window_bounds = array<i64: 8, 256>}, {pipeline_mode = #tpu.pipeline_mode<synchronous>, transform_indices = @transform_1, window_bounds = array<i64: 256, 512>}, {transform_indices = @transform_2, window_bounds = array<i64: 8, 512>}]} {
    %c0 = arith.constant 0 : index
    %c0_0 = arith.constant 0 : index
    %0 = vector.load %arg3[%c0, %c0_0] : memref<256x512xf32, #tpu.memory_space<vmem>>, vector<256x512xf32>
    %c2_i32 = arith.constant 2 : i32
    %1 = arith.cmpi ne, %arg1, %c2_i32 : i32
    %2 = arith.extui %1 : i1 to i32
    %c0_i32 = arith.constant 0 : i32
    %3 = arith.cmpi ne, %2, %c0_i32 : i32
    scf.if %3 {
      %c0_3 = arith.constant 0 : index
      %c0_4 = arith.constant 0 : index
      %7 = vector.load %arg2[%c0_3, %c0_4] : memref<8x256xf32, #tpu.memory_space<vmem>>, vector<8x256xf32>
      %cst = arith.constant dense<0.000000e+00> : vector<8x512xf32>
      %8 = tpu.matmul %7, %0, %cst {dimension_numbers = #tpu.dot_dimension_numbers<[1], [0], [0], [1], [0, 0, 1, 1], [], []>} : vector<8x256xf32>, vector<256x512xf32>, vector<8x512xf32> -> vector<8x512xf32>
      %c0_5 = arith.constant 0 : index
      %c0_6 = arith.constant 0 : index
      %9 = vector.load %arg4[%c0_5, %c0_6] : memref<8x512xf32, #tpu.memory_space<vmem>>, vector<8x512xf32>
      tpu.vector_store %arg4[%c0_5, %c0_6], %8 {strides = array<i32>} : memref<8x512xf32, #tpu.memory_space<vmem>>, vector<8x512xf32>,
    } else {
    }
    %c2_i32_1 = arith.constant 2 : i32
    %4 = arith.cmpi eq, %arg1, %c2_i32_1 : i32
    %5 = arith.extui %4 : i1 to i32
    %c0_i32_2 = arith.constant 0 : i32
    %6 = arith.cmpi ne, %5, %c0_i32_2 : i32
    scf.if %6 {
      %c0_3 = arith.constant 0 : index
      %c0_4 = arith.constant 0 : index
      %7 = vector.load %arg2[%c0_3, %c0_4] : memref<8x256xf32, #tpu.memory_space<vmem>>, vector<8x256xf32>
      %8 = tpu.iota {dimensions = array<i32: 1>} : vector<8x256xi32>
      %c256_i32 = arith.constant 256 : i32
      %9 = arith.muli %arg1, %c256_i32 : i32
      %10 = vector.broadcast %9 : i32 to vector<8x256xi32>
      %11 = arith.addi %10, %8 : vector<8x256xi32>
      %c600_i32 = arith.constant 600 : i32
      %12 = vector.broadcast %c600_i32 : i32 to vector<8x256xi32>
      %13 = arith.cmpi slt, %11, %12 : vector<8x256xi32>
      %cst = arith.constant 0.000000e+00 : f32
      %14 = vector.broadcast %cst : f32 to vector<8x256xf32>
      %15 = arith.select %13, %7, %14 : vector<8x256xi1>, vector<8x256xf32>
      %cst_5 = arith.constant dense<0.000000e+00> : vector<8x512xf32>
      %16 = tpu.matmul %15, %0, %cst_5 {dimension_numbers = #tpu.dot_dimension_numbers<[1], [0], [0], [1], [0, 0, 1, 1], [], []>} : vector<8x256xf32>, vector<256x512xf32>, vector<8x512xf32> -> vector<8x512xf32>
      %c0_6 = arith.constant 0 : index
      %c0_7 = arith.constant 0 : index
      %17 = vector.load %arg4[%c0_6, %c0_7] : memref<8x512xf32, #tpu.memory_space<vmem>>, vector<8x512xf32>
      tpu.vector_store %arg4[%c0_6, %c0_7], %16 {strides = array<i32>} : memref<8x512xf32, #tpu.memory_space<vmem>>, vector<8x512xf32>,
    } else {
    }
    return
  }
  func.func @transform_0(%arg0: i32, %arg1: i32) -> (i32, i32) {
    %c0_i32 = arith.constant 0 : i32
    return %arg0, %arg1 : i32, i32
  }
  func.func @transform_1(%arg0: i32, %arg1: i32) -> (i32, i32) {
    %c0_i32 = arith.constant 0 : i32
    %c0_i32_0 = arith.constant 0 : i32
    %c0_i32_1 = arith.constant 0 : i32
    return %c0_i32, %c0_i32_0 : i32, i32
  }
  func.func @transform_2(%arg0: i32, %arg1: i32) -> (i32, i32) {
    %c0_i32 = arith.constant 0 : i32
    return %arg0, %arg1 : i32, i32
  }
}

</mosaic_0001>

<llo_original>
// kernel: tpu_custom_call.1
$region0: #{tpu_custom_call.1}
  #allocation0 [shape = 'u32[]', space=smem, size = 0x4, offset = 0x4, fixed_abs, tag = 'smem constant byte address 0x4 - core index']
  #allocation1 [shape = 'u32[144,128]{1,0:T(1,128)}', space=vmem, size = 0x12000, scoped, tag = 'internal scratch']
  %s0 = inlined_call_operand.hbm [shape: f32[16,600], index: 0, kind: input, shape index: {}]
  %s1 = inlined_call_operand.hbm [shape: f32[256,512], index: 1, kind: input, shape index: {}]
  %s2 = inlined_call_operand.hbm [shape: f32[16,1200], index: 2, kind: output, shape index: {}]
  %s3 = sld [smem:[#allocation0]]
  $region57: #{tpu_custom_call.1} parent=0
    _
  %s5 = ssub.s32 1, %s3
  %s6 = scalar_select 0, %s5, %s3
  $region1: #{tpu_custom_call.1} parent=0
    #allocation2 [shape = 'u8[16384]{0}', space=vmem, size = 0x4000, scoped, tag = 'input window, operand 0']
    #allocation3 [shape = 's32[2]{0}', space=sflag, size = 0x8, scoped, tag = 'scoped memory for tpu_custom_call.1']
    #allocation4 [shape = 's32[2]{0}', space=sflag, size = 0x8, scoped, tag = 'scoped memory for tpu_custom_call.1']
    #allocation5 [shape = 'u8[524288]{0}', space=vmem, size = 0x80000, scoped, tag = 'input window, operand 1, single buffered']
    #allocation6 [shape = 's32[1]{0}', space=sflag, size = 0x4, scoped, tag = 'scoped memory for tpu_custom_call.1']
    #allocation7 [shape = 'u8[32768]{0}', space=vmem, size = 0x8000, scoped, tag = 'output window, operand 0']
    %7 = vsyncpa [#allocation3], 0
    %s8 = scalar_lea.sflag [#allocation3], 1
    %9 = vsyncpa %s8, 0
    %10 = vsyncpa [#allocation6], 0
    %11 = vsyncpa [#allocation4], 0
    %s12 = scalar_lea.sflag [#allocation4], 1
    %13 = vsyncpa %s12, 0
    loop: start=0, step=1, limit=8
    $region2: #{tpu_custom_call.1} parent=1 // loop_pre_header
      _
    $region3: #{tpu_custom_call.1} parent=1 // loop_header
      %s15 = sphi 0, %s19
      %p16 = scmp.ge.s32.totalorder %s15, 8
      %s22 = sphi 0, %s34
      %s23 = sphi 0, %s30
      %s24 = sphi 0, %s22
      %s25 = sphi 0, %s23
      %s26 = sphi 0, %s24
      %s27 = sphi 0, %s25
      %s39 = sphi 0, %s41
      %s42 = sphi 0, %s39
      %s43 = sphi 0, %s42
      %s59 = sphi 0, %s43
      %s63 = sphi 0, %s63
      %s65 = sphi 0, %s63
      %s66 = sphi 0, %s65
      %s80 = sphi 0, %s66
      %s88 = sphi 0, %s90
      %s91 = sphi 0, %s88
      %s92 = sphi 0, %s91
      %s108 = sphi 0, %s92
    $region4: #{tpu_custom_call.1} parent=1 // loop_header_branch
      %18 = sbr.rel (%p16) target = $region8
    $region5: #{tpu_custom_call.1} parent=1 // loop_body
      %s20 = ssub.s32 %s15, 1
      %s21 = ssub.s32 %s15, 2
      %s28 = sadd.s32 1, %s23
      %p29 = scmp.ge.s32.totalorder %s28, 3
      %s30 = scalar_select %p29, 0, %s28
      %s31 = sadd.s32 1, %s22
      %s32 = scalar_select %p29, %s31, %s22
      %p33 = scmp.ge.s32.totalorder %s32, 2
      %s34 = scalar_select %p33, 0, %s32
      %s35 = ssub.s32 %s22, %s34
      %s36 = ssub.s32 %s23, %s30
      %s37 = sor.u32 %s35, %s36
      %p38 = scmp.eq.s32.totalorder %s37, 0
      %s40 = sadd.s32 %s39, 1
      %s41 = scalar_select %p38, %s39, %s40
      %p44 = pneg %p38
      %p45 = scmp.eq.s32.totalorder %s15, 5
      %p46 = por %p44, %p45
      %p47 = scmp.ne.s32.totalorder %s39, %s42
      %p48 = scmp.eq.s32.totalorder %s15, 0
      %p49 = por %p47, %p48
      %p50 = scmp.ne.s32.totalorder %s39, %s42
      %p51 = scmp.eq.s32.totalorder %s20, 5
      %p52 = por %p50, %p51
      %p53 = scmp.ne.s32.totalorder %s42, %s43
      %p54 = scmp.eq.s32.totalorder %s20, 0
      %p55 = por %p53, %p54
      %p56 = scmp.ne.s32.totalorder %s42, %s43
      %p57 = scmp.eq.s32.totalorder %s21, 5
      %p58 = por %p56, %p57
      %p60 = scmp.ne.s32.totalorder %s43, %s59
      %p61 = scmp.eq.s32.totalorder %s21, 0
      %p62 = por %p60, %p61
      %s64 = sadd.s32 %s63, 1
      %p67 = scmp.eq.s32.totalorder %s15, 5
      %p68 = scmp.ne.s32.totalorder %s63, %s65
      %p69 = scmp.eq.s32.totalorder %s15, 0
      %p70 = por %p68, %p69
      %p71 = scmp.ne.s32.totalorder %s63, %s65
      %p72 = scmp.eq.s32.totalorder %s20, 5
      %p73 = por %p71, %p72
      %p74 = scmp.ne.s32.totalorder %s65, %s66
      %p75 = scmp.eq.s32.totalorder %s20, 0
      %p76 = por %p74, %p75
      %p77 = scmp.ne.s32.totalorder %s65, %s66
      %p78 = scmp.eq.s32.totalorder %s21, 5
      %p79 = por %p77, %p78
      %p81 = scmp.ne.s32.totalorder %s66, %s80
      %p82 = scmp.eq.s32.totalorder %s21, 0
      %p83 = por %p81, %p82
      %s84 = ssub.s32 %s22, %s34
      %s85 = ssub.s32 %s23, %s30
      %s86 = sor.u32 %s84, %s85
      %p87 = scmp.eq.s32.totalorder %s86, 0
      %s89 = sadd.s32 %s88, 1
      %s90 = scalar_select %p87, %s88, %s89
      %p93 = pneg %p87
      %p94 = scmp.eq.s32.totalorder %s15, 5
      %p95 = por %p93, %p94
      %p96 = scmp.ne.s32.totalorder %s88, %s91
      %p97 = scmp.eq.s32.totalorder %s15, 0
      %p98 = por %p96, %p97
      %p99 = scmp.ne.s32.totalorder %s88, %s91
      %p100 = scmp.eq.s32.totalorder %s20, 5
      %p101 = por %p99, %p100
      %p102 = scmp.ne.s32.totalorder %s91, %s92
      %p103 = scmp.eq.s32.totalorder %s20, 0
      %p104 = por %p102, %p103
      %p105 = scmp.ne.s32.totalorder %s91, %s92
      %p106 = scmp.eq.s32.totalorder %s21, 5
      %p107 = por %p105, %p106
      %p109 = scmp.ne.s32.totalorder %s92, %s108
      %p110 = scmp.eq.s32.totalorder %s21, 0
      %p111 = por %p109, %p110
      %p112 = scmp.le.s32.totalorder 1, %s15
      %p113 = scmp.lt.s32.totalorder %s15, 7
      %p114 = pnand %p112, %p113
      %p115 = pneg %p114
      // Predicated region
      $region9: #{tpu_custom_call.1} parent=5 // pred_check
        _
      $region10: #{tpu_custom_call.1} parent=5 // pred_check_branch
        %117 = sbr.rel (%p114) target = $region12
      $region11: #{tpu_custom_call.1} parent=5 // pred_region
        %s118 = ssub.s32 %s15, 1
        // Predicated region
        $region13: #{tpu_custom_call.1} parent=11 // pred_check
          %p119 = pneg %p76
        $region14: #{tpu_custom_call.1} parent=11 // pred_check_branch
          %121 = sbr.rel (%p119) target = $region16
        $region15: #{tpu_custom_call.1} parent=11 // pred_region
          %s123 = ssub.s32 16384, 16384
          %124 = vsyncadd [#allocation6], %s123
          %s125 = sshll.u32 [#allocation5], 4
          %s126 = int_to_ptr.vmem [resolvable:$true] %s125
          %131 = dma.hbm_to_vmem [thread:$0]  %s1, 16384, %s126, [#allocation6], 512, 512, 32
        $region16: #{tpu_custom_call.1} parent=11 // pred_fallthru
          _
      $region12: #{tpu_custom_call.1} parent=5 // pred_fallthru
        _
      %p132 = scmp.lt.s32.totalorder %s15, 6
      // Predicated region
      $region17: #{tpu_custom_call.1} parent=5 // pred_check
        %p133 = pneg %p132
      $region18: #{tpu_custom_call.1} parent=5 // pred_check_branch
        %135 = sbr.rel (%p133) target = $region20
      $region19: #{tpu_custom_call.1} parent=5 // pred_region
        // Predicated region
        $region21: #{tpu_custom_call.1} parent=19 // pred_check
          %p136 = pneg %p49
        $region22: #{tpu_custom_call.1} parent=19 // pred_check_branch
          %138 = sbr.rel (%p136) target = $region24
        $region23: #{tpu_custom_call.1} parent=19 // pred_region
          %s139 = sand.u32 %s39, 1
          %s140 = scalar_lea.sflag [#allocation3], %s139
          %s141 = sand.u32 %s39, 1
          %s142 = smul.addr %s141, 16
          %s143 = scalar_lea.vmem [#allocation2], %s142
          %s144 = smul.u32 2, %s23
          %s145 = ssub.s32 5, %s144
          %p146 = scmp.lt.s32.totalorder %s145, 2
          %s147 = scalar_select %p146, %s145, 2
          %s148 = smul.u32 128, %s147
          %s150 = ssub.s32 256, %s148
          %151 = vsyncadd %s140, %s150
          %p152 = scmp.ne.s32.totalorder 0, %s148
          %s153 = smul.addr %s22, 5
          %s154 = sadd.s32 %s144, %s153
          %s155 = smul.addr %s154, 128
          %s156 = scalar_lea.hbm %s0, %s155
          %s157 = smul.u32 %s147, 8
          %s158 = sshll.u32 %s157, 4
          %s159 = sshll.u32 %s143, 4
          %s160 = int_to_ptr.vmem [resolvable:$true] %s159
          %162 = dma.hbm_to_vmem [thread:$0]  (%p152), %s156, %s158, %s160, %s140
        $region24: #{tpu_custom_call.1} parent=19 // pred_fallthru
          _
      $region20: #{tpu_custom_call.1} parent=5 // pred_fallthru
        _
      %p163 = scmp.le.s32.totalorder 1, %s15
      %p164 = scmp.lt.s32.totalorder %s15, 7
      %p165 = pnand %p163, %p164
      %p166 = pneg %p165
      // Predicated region
      $region25: #{tpu_custom_call.1} parent=5 // pred_check
        _
      $region26: #{tpu_custom_call.1} parent=5 // pred_check_branch
        %168 = sbr.rel (%p165) target = $region28
      $region27: #{tpu_custom_call.1} parent=5 // pred_region
        %s169 = ssub.s32 %s15, 1
        %s170 = sand.u32 %s42, 1
        %s171 = scalar_lea.sflag [#allocation3], %s170
        %s172 = sand.u32 %s42, 1
        %s173 = smul.addr %s172, 16
        %s174 = scalar_lea.vmem [#allocation2], %s173
        // Predicated region
        $region29: #{tpu_custom_call.1} parent=27 // pred_check
          %p175 = pneg %p55
        $region30: #{tpu_custom_call.1} parent=27 // pred_check_branch
          %177 = sbr.rel (%p175) target = $region32
        $region31: #{tpu_custom_call.1} parent=27 // pred_region
          %178 = dma.done %s171, 256
        $region32: #{tpu_custom_call.1} parent=27 // pred_fallthru
          _
        // Predicated region
        $region33: #{tpu_custom_call.1} parent=27 // pred_check
          %p179 = pneg %p76
        $region34: #{tpu_custom_call.1} parent=27 // pred_check_branch
          %181 = sbr.rel (%p179) target = $region36
        $region35: #{tpu_custom_call.1} parent=27 // pred_region
          %182 = dma.done [#allocation6], 16384
        $region36: #{tpu_custom_call.1} parent=27 // pred_fallthru
          _
        %s183 = sand.u32 %s42, 1
        %s184 = scalar_lea.sflag [#allocation3], %s183
        %s185 = sand.u32 %s42, 1
        %s186 = smul.addr %s185, 16
        %s187 = scalar_lea.vmem [#allocation2], %s186
        %p188 = pneg %p55
        %p189 = pneg %p52
        %p190 = pneg %p76
        %p191 = pneg %p73
        %p192 = pneg %p104
        %p193 = pneg %p101
        %s194 = sand.u32 %s91, 1
        %s195 = scalar_lea.sflag [#allocation4], %s194
        %s196 = sand.u32 %s91, 1
        %s197 = smul.addr %s196, 32
        %s198 = scalar_lea.vmem [#allocation7], %s197
        %s199 = smul.u32 2, %s25
        %s200 = ssub.s32 5, %s199
        %p201 = scmp.lt.s32.totalorder %s200, 2
        %s202 = scalar_select %p201, %s200, 2
        %s203 = smul.u32 128, %s202
        %s204 = smul.u32 4, %s25
        %s205 = ssub.s32 10, %s204
        %p206 = scmp.lt.s32.totalorder %s205, 4
        %s207 = scalar_select %p206, %s205, 4
        %s208 = smul.u32 128, %s207
        %v209 = vld [vmem:[#allocation5] sm:$0xff]
        %v210 = vld [vmem:[#allocation5 + $0x8] sm:$0xff]
        %v211 = vld [vmem:[#allocation5 + $0x10] sm:$0xff]
        %v212 = vld [vmem:[#allocation5 + $0x18] sm:$0xff]
        %v213 = vld [vmem:[#allocation5 + $0x20] sm:$0xff]
        %v214 = vld [vmem:[#allocation5 + $0x28] sm:$0xff]
        %v215 = vld [vmem:[#allocation5 + $0x30] sm:$0xff]
        %v216 = vld [vmem:[#allocation5 + $0x38] sm:$0xff]
        %v217 = vld [vmem:[#allocation5 + $0x40] sm:$0xff]
        %v218 = vld [vmem:[#allocation5 + $0x48] sm:$0xff]
        %v219 = vld [vmem:[#allocation5 + $0x50] sm:$0xff]
        %v220 = vld [vmem:[#allocation5 + $0x58] sm:$0xff]
        %v221 = vld [vmem:[#allocation5 + $0x60] sm:$0xff]
        %v222 = vld [vmem:[#allocation5 + $0x68] sm:$0xff]
        %v223 = vld [vmem:[#allocation5 + $0x70] sm:$0xff]
        %v224 = vld [vmem:[#allocation5 + $0x78] sm:$0xff]
        %v225 = vld [vmem:[#allocation5 + $0x80] sm:$0xff]
        %v226 = vld [vmem:[#allocation5 + $0x88] sm:$0xff]
        %v227 = vld [vmem:[#allocation5 + $0x90] sm:$0xff]
        %v228 = vld [vmem:[#allocation5 + $0x98] sm:$0xff]
        %v229 = vld [vmem:[#allocation5 + $0xa0] sm:$0xff]
        %v230 = vld [vmem:[#allocation5 + $0xa8] sm:$0xff]
        %v231 = vld [vmem:[#allocation5 + $0xb0] sm:$0xff]
        %v232 = vld [vmem:[#allocation5 + $0xb8] sm:$0xff]
        %v233 = vld [vmem:[#allocation5 + $0xc0] sm:$0xff]
        %v234 = vld [vmem:[#allocation5 + $0xc8] sm:$0xff]
        %v235 = vld [vmem:[#allocation5 + $0xd0] sm:$0xff]
        %v236 = vld [vmem:[#allocation5 + $0xd8] sm:$0xff]
        %v237 = vld [vmem:[#allocation5 + $0xe0] sm:$0xff]
        %v238 = vld [vmem:[#allocation5 + $0xe8] sm:$0xff]
        %v239 = vld [vmem:[#allocation5 + $0xf0] sm:$0xff]
        %v240 = vld [vmem:[#allocation5 + $0xf8] sm:$0xff]
        %v241 = vld [vmem:[#allocation5 + $0x100] sm:$0xff]
        %v242 = vld [vmem:[#allocation5 + $0x108] sm:$0xff]
        %v243 = vld [vmem:[#allocation5 + $0x110] sm:$0xff]
        %v244 = vld [vmem:[#allocation5 + $0x118] sm:$0xff]
        %v245 = vld [vmem:[#allocation5 + $0x120] sm:$0xff]
        %v246 = vld [vmem:[#allocation5 + $0x128] sm:$0xff]
        %v247 = vld [vmem:[#allocation5 + $0x130] sm:$0xff]
        %v248 = vld [vmem:[#allocation5 + $0x138] sm:$0xff]
        %v249 = vld [vmem:[#allocation5 + $0x140] sm:$0xff]
        %v250 = vld [vmem:[#allocation5 + $0x148] sm:$0xff]
        %v251 = vld [vmem:[#allocation5 + $0x150] sm:$0xff]
        %v252 = vld [vmem:[#allocation5 + $0x158] sm:$0xff]
        %v253 = vld [vmem:[#allocation5 + $0x160] sm:$0xff]
        %v254 = vld [vmem:[#allocation5 + $0x168] sm:$0xff]
        %v255 = vld [vmem:[#allocation5 + $0x170] sm:$0xff]
        %v256 = vld [vmem:[#allocation5 + $0x178] sm:$0xff]
        %v257 = vld [vmem:[#allocation5 + $0x180] sm:$0xff]
        %v258 = vld [vmem:[#allocation5 + $0x188] sm:$0xff]
        %v259 = vld [vmem:[#allocation5 + $0x190] sm:$0xff]
        %v260 = vld [vmem:[#allocation5 + $0x198] sm:$0xff]
        %v261 = vld [vmem:[#allocation5 + $0x1a0] sm:$0xff]
        %v262 = vld [vmem:[#allocation5 + $0x1a8] sm:$0xff]
        %v263 = vld [vmem:[#allocation5 + $0x1b0] sm:$0xff]
        %v264 = vld [vmem:[#allocation5 + $0x1b8] sm:$0xff]
        %v265 = vld [vmem:[#allocation5 + $0x1c0] sm:$0xff]
        %v266 = vld [vmem:[#allocation5 + $0x1c8] sm:$0xff]
        %v267 = vld [vmem:[#allocation5 + $0x1d0] sm:$0xff]
        %v268 = vld [vmem:[#allocation5 + $0x1d8] sm:$0xff]
        %v269 = vld [vmem:[#allocation5 + $0x1e0] sm:$0xff]
        %v270 = vld [vmem:[#allocation5 + $0x1e8] sm:$0xff]
        %v271 = vld [vmem:[#allocation5 + $0x1f0] sm:$0xff]
        %v272 = vld [vmem:[#allocation5 + $0x1f8] sm:$0xff]
        %v273 = vld [vmem:[#allocation5 + $0x200] sm:$0xff]
        %v274 = vld [vmem:[#allocation5 + $0x208] sm:$0xff]
        %v275 = vld [vmem:[#allocation5 + $0x210] sm:$0xff]
        %v276 = vld [vmem:[#allocation5 + $0x218] sm:$0xff]
        %v277 = vld [vmem:[#allocation5 + $0x220] sm:$0xff]
        %v278 = vld [vmem:[#allocation5 + $0x228] sm:$0xff]
        %v279 = vld [vmem:[#allocation5 + $0x230] sm:$0xff]
        %v280 = vld [vmem:[#allocation5 + $0x238] sm:$0xff]
        %v281 = vld [vmem:[#allocation5 + $0x240] sm:$0xff]
        %v282 = vld [vmem:[#allocation5 + $0x248] sm:$0xff]
        %v283 = vld [vmem:[#allocation5 + $0x250] sm:$0xff]
        %v284 = vld [vmem:[#allocation5 + $0x258] sm:$0xff]
        %v285 = vld [vmem:[#allocation5 + $0x260] sm:$0xff]
        %v286 = vld [vmem:[#allocation5 + $0x268] sm:$0xff]
        %v287 = vld [vmem:[#allocation5 + $0x270] sm:$0xff]
        %v288 = vld [vmem:[#allocation5 + $0x278] sm:$0xff]
        %v289 = vld [vmem:[#allocation5 + $0x280] sm:$0xff]
        %v290 = vld [vmem:[#allocation5 + $0x288] sm:$0xff]
        %v291 = vld [vmem:[#allocation5 + $0x290] sm:$0xff]
        %v292 = vld [vmem:[#allocation5 + $0x298] sm:$0xff]
        %v293 = vld [vmem:[#allocation5 + $0x2a0] sm:$0xff]
        %v294 = vld [vmem:[#allocation5 + $0x2a8] sm:$0xff]
        %v295 = vld [vmem:[#allocation5 + $0x2b0] sm:$0xff]
        %v296 = vld [vmem:[#allocation5 + $0x2b8] sm:$0xff]
        %v297 = vld [vmem:[#allocation5 + $0x2c0] sm:$0xff]
        %v298 = vld [vmem:[#allocation5 + $0x2c8] sm:$0xff]
        %v299 = vld [vmem:[#allocation5 + $0x2d0] sm:$0xff]
        %v300 = vld [vmem:[#allocation5 + $0x2d8] sm:$0xff]
        %v301 = vld [vmem:[#allocation5 + $0x2e0] sm:$0xff]
        %v302 = vld [vmem:[#allocation5 + $0x2e8] sm:$0xff]
        %v303 = vld [vmem:[#allocation5 + $0x2f0] sm:$0xff]
        %v304 = vld [vmem:[#allocation5 + $0x2f8] sm:$0xff]
        %v305 = vld [vmem:[#allocation5 + $0x300] sm:$0xff]
        %v306 = vld [vmem:[#allocation5 + $0x308] sm:$0xff]
        %v307 = vld [vmem:[#allocation5 + $0x310] sm:$0xff]
        %v308 = vld [vmem:[#allocation5 + $0x318] sm:$0xff]
        %v309 = vld [vmem:[#allocation5 + $0x320] sm:$0xff]
        %v310 = vld [vmem:[#allocation5 + $0x328] sm:$0xff]
        %v311 = vld [vmem:[#allocation5 + $0x330] sm:$0xff]
        %v312 = vld [vmem:[#allocation5 + $0x338] sm:$0xff]
        %v313 = vld [vmem:[#allocation5 + $0x340] sm:$0xff]
        %v314 = vld [vmem:[#allocation5 + $0x348] sm:$0xff]
        %v315 = vld [vmem:[#allocation5 + $0x350] sm:$0xff]
        %v316 = vld [vmem:[#allocation5 + $0x358] sm:$0xff]
        %v317 = vld [vmem:[#allocation5 + $0x360] sm:$0xff]
        %v318 = vld [vmem:[#allocation5 + $0x368] sm:$0xff]
        %v319 = vld [vmem:[#allocation5 + $0x370] sm:$0xff]
        %v320 = vld [vmem:[#allocation5 + $0x378] sm:$0xff]
        %v321 = vld [vmem:[#allocation5 + $0x380] sm:$0xff]
        %v322 = vld [vmem:[#allocation5 + $0x388] sm:$0xff]
        %v323 = vld [vmem:[#allocation5 + $0x390] sm:$0xff]
        %v324 = vld [vmem:[#allocation5 + $0x398] sm:$0xff]
        %v325 = vld [vmem:[#allocation5 + $0x3a0] sm:$0xff]
        %v326 = vld [vmem:[#allocation5 + $0x3a8] sm:$0xff]
        %v327 = vld [vmem:[#allocation5 + $0x3b0] sm:$0xff]
        %v328 = vld [vmem:[#allocation5 + $0x3b8] sm:$0xff]
        %v329 = vld [vmem:[#allocation5 + $0x3c0] sm:$0xff]
        %v330 = vld [vmem:[#allocation5 + $0x3c8] sm:$0xff]
        %v331 = vld [vmem:[#allocation5 + $0x3d0] sm:$0xff]
        %v332 = vld [vmem:[#allocation5 + $0x3d8] sm:$0xff]
        %v333 = vld [vmem:[#allocation5 + $0x3e0] sm:$0xff]
        %v334 = vld [vmem:[#allocation5 + $0x3e8] sm:$0xff]
        %v335 = vld [vmem:[#allocation5 + $0x3f0] sm:$0xff]
        %v336 = vld [vmem:[#allocation5 + $0x3f8] sm:$0xff]
        %p337 = scmp.ne.s32.totalorder %s25, 2
        // Predicated region
        $region37: #{tpu_custom_call.1} parent=27 // pred_check
          %p338 = pneg %p337
        $region38: #{tpu_custom_call.1} parent=27 // pred_check_branch
          %340 = sbr.rel (%p338) target = $region40
        $region39: #{tpu_custom_call.1} parent=27 // pred_region
          %v341 = vld [vmem:[%s174] sm:$0xff]
          %v342 = vld [vmem:[%s174 + $0x8] sm:$0xff]
          %343 = vmatprep.subr.mxu0 %v210
          %344 = vmatpush1.msra.mxu0 %v209
          %345 = vmatprep.subr.mxu0 %v214
          %346 = vmatpush1.msra.mxu0 %v213
          %347 = vmatprep.subr.mxu0 %v218
          %348 = vmatpush1.msra.mxu0 %v217
          %349 = vmatprep.subr.mxu0 %v222
          %350 = vmatpush1.msra.mxu0 %v221
          %351 = vmatprep.subr.mxu0 %v226
          %352 = vmatpush1.msra.mxu0 %v225
          %353 = vmatprep.subr.mxu0 %v230
          %354 = vmatpush1.msra.mxu0 %v229
          %355 = vmatprep.subr.mxu0 %v234
          %356 = vmatpush1.msra.mxu0 %v233
          %357 = vmatprep.subr.mxu0 %v238
          %358 = vmatpush1.msra.mxu0 %v237
          %359 = vmatprep.subr.mxu0 %v242
          %360 = vmatpush1.msra.mxu0 %v241
          %361 = vmatprep.subr.mxu0 %v246
          %362 = vmatpush1.msra.mxu0 %v245
          %363 = vmatprep.subr.mxu0 %v250
          %364 = vmatpush1.msra.mxu0 %v249
          %365 = vmatprep.subr.mxu0 %v254
          %366 = vmatpush1.msra.mxu0 %v253
          %367 = vmatprep.subr.mxu0 %v258
          %368 = vmatpush1.msra.mxu0 %v257
          %369 = vmatprep.subr.mxu0 %v262
          %370 = vmatpush1.msra.mxu0 %v261
          %371 = vmatprep.subr.mxu0 %v266
          %372 = vmatpush1.msra.mxu0 %v265
          %373 = vmatprep.subr.mxu0 %v270
          %374 = vmatpush1.msra.mxu0 %v269
          %375 = vmatprep.subr.mxu0 %v274
          %376 = vmatpush1.msra.mxu0 %v273
          %377 = vmatprep.subr.mxu0 %v278
          %378 = vmatpush1.msra.mxu0 %v277
          %379 = vmatprep.subr.mxu0 %v282
          %380 = vmatpush1.msra.mxu0 %v281
          %381 = vmatprep.subr.mxu0 %v286
          %382 = vmatpush1.msra.mxu0 %v285
          %383 = vmatprep.subr.mxu0 %v290
          %384 = vmatpush1.msra.mxu0 %v289
          %385 = vmatprep.subr.mxu0 %v294
          %386 = vmatpush1.msra.mxu0 %v293
          %387 = vmatprep.subr.mxu0 %v298
          %388 = vmatpush1.msra.mxu0 %v297
          %389 = vmatprep.subr.mxu0 %v302
          %390 = vmatpush1.msra.mxu0 %v301
          %391 = vmatprep.subr.mxu0 %v306
          %392 = vmatpush1.msra.mxu0 %v305
          %393 = vmatprep.subr.mxu0 %v310
          %394 = vmatpush1.msra.mxu0 %v309
          %395 = vmatprep.subr.mxu0 %v314
          %396 = vmatpush1.msra.mxu0 %v313
          %397 = vmatprep.subr.mxu0 %v318
          %398 = vmatpush1.msra.mxu0 %v317
          %399 = vmatprep.subr.mxu0 %v322
          %400 = vmatpush1.msra.mxu0 %v321
          %401 = vmatprep.subr.mxu0 %v326
          %402 = vmatpush1.msra.mxu0 %v325
          %403 = vmatprep.subr.mxu0 %v330
          %404 = vmatpush1.msra.mxu0 %v329
          %405 = vmatprep.subr.mxu0 %v334
          %406 = vmatpush1.msra.mxu0 %v333
          %407 = vmatprep.mubr.f32.mxu0 %v342
          %408 = vmatmul.mubr.f32.gmra.mrb[0].mxu0 %v341
          %v409 = vpop.f32.mrb[0].mxu0
          %v410 = vadd.f32 0.0, %v409
          %v411 = vpop.f32.mrb[0].mxu0
          %v412 = vadd.f32 0.0, %v411
          %413 = vdwg.mxu0
          %414 = vmatprep.subr.mxu0 %v212
          %415 = vmatpush1.msra.mxu0 %v211
          %416 = vmatprep.subr.mxu0 %v216
          %417 = vmatpush1.msra.mxu0 %v215
          %418 = vmatprep.subr.mxu0 %v220
          %419 = vmatpush1.msra.mxu0 %v219
          %420 = vmatprep.subr.mxu0 %v224
          %421 = vmatpush1.msra.mxu0 %v223
          %422 = vmatprep.subr.mxu0 %v228
          %423 = vmatpush1.msra.mxu0 %v227
          %424 = vmatprep.subr.mxu0 %v232
          %425 = vmatpush1.msra.mxu0 %v231
          %426 = vmatprep.subr.mxu0 %v236
          %427 = vmatpush1.msra.mxu0 %v235
          %428 = vmatprep.subr.mxu0 %v240
          %429 = vmatpush1.msra.mxu0 %v239
          %430 = vmatprep.subr.mxu0 %v244
          %431 = vmatpush1.msra.mxu0 %v243
          %432 = vmatprep.subr.mxu0 %v248
          %433 = vmatpush1.msra.mxu0 %v247
          %434 = vmatprep.subr.mxu0 %v252
          %435 = vmatpush1.msra.mxu0 %v251
          %436 = vmatprep.subr.mxu0 %v256
          %437 = vmatpush1.msra.mxu0 %v255
          %438 = vmatprep.subr.mxu0 %v260
          %439 = vmatpush1.msra.mxu0 %v259
          %440 = vmatprep.subr.mxu0 %v264
          %441 = vmatpush1.msra.mxu0 %v263
          %442 = vmatprep.subr.mxu0 %v268
          %443 = vmatpush1.msra.mxu0 %v267
          %444 = vmatprep.subr.mxu0 %v272
          %445 = vmatpush1.msra.mxu0 %v271
          %446 = vmatprep.subr.mxu0 %v276
          %447 = vmatpush1.msra.mxu0 %v275
          %448 = vmatprep.subr.mxu0 %v280
          %449 = vmatpush1.msra.mxu0 %v279
          %450 = vmatprep.subr.mxu0 %v284
          %451 = vmatpush1.msra.mxu0 %v283
          %452 = vmatprep.subr.mxu0 %v288
          %453 = vmatpush1.msra.mxu0 %v287
          %454 = vmatprep.subr.mxu0 %v292
          %455 = vmatpush1.msra.mxu0 %v291
          %456 = vmatprep.subr.mxu0 %v296
          %457 = vmatpush1.msra.mxu0 %v295
          %458 = vmatprep.subr.mxu0 %v300
          %459 = vmatpush1.msra.mxu0 %v299
          %460 = vmatprep.subr.mxu0 %v304
          %461 = vmatpush1.msra.mxu0 %v303
          %462 = vmatprep.subr.mxu0 %v308
          %463 = vmatpush1.msra.mxu0 %v307
          %464 = vmatprep.subr.mxu0 %v312
          %465 = vmatpush1.msra.mxu0 %v311
          %466 = vmatprep.subr.mxu0 %v316
          %467 = vmatpush1.msra.mxu0 %v315
          %468 = vmatprep.subr.mxu0 %v320
          %469 = vmatpush1.msra.mxu0 %v319
          %470 = vmatprep.subr.mxu0 %v324
          %471 = vmatpush1.msra.mxu0 %v323
          %472 = vmatprep.subr.mxu0 %v328
          %473 = vmatpush1.msra.mxu0 %v327
          %474 = vmatprep.subr.mxu0 %v332
          %475 = vmatpush1.msra.mxu0 %v331
          %476 = vmatprep.subr.mxu0 %v336
          %477 = vmatpush1.msra.mxu0 %v335
          %478 = vmatprep.mubr.f32.mxu0 %v342
          %479 = vmatmul.mubr.f32.gmra.mrb[0].mxu0 %v341
          %v480 = vpop.f32.mrb[0].mxu0
          %v481 = vadd.f32 0.0, %v480
          %v482 = vpop.f32.mrb[0].mxu0
          %v483 = vadd.f32 0.0, %v482
          %484 = vdwg.mxu0
          %485 = vst [vmem:[%s198] sm:$0xff] %v410
          %486 = vst [vmem:[%s198 + $0x8] sm:$0xff] %v412
          %487 = vst [vmem:[%s198 + $0x10] sm:$0xff] %v481
          %488 = vst [vmem:[%s198 + $0x18] sm:$0xff] %v483
        $region40: #{tpu_custom_call.1} parent=27 // pred_fallthru
          _
        %p489 = scmp.eq.s32.totalorder %s25, 2
        // Predicated region
        $region41: #{tpu_custom_call.1} parent=27 // pred_check
          %p490 = pneg %p489
        $region42: #{tpu_custom_call.1} parent=27 // pred_check_branch
          %492 = sbr.rel (%p490) target = $region44
        $region43: #{tpu_custom_call.1} parent=27 // pred_region
          %v493 = vld [vmem:[%s174] sm:$0xff]
          %v494 = vld [vmem:[%s174 + $0x8] sm:$0xff]
          %v495 = vlaneseq
          %v496 = vand.u32 %v495, 127
          %v497 = vadd.s32 %v496, 128
          %s498 = smul.u32 %s25, 256
          %v499 = vstv %s498
          %v500 = vadd.s32 %v499, %v496
          %v501 = vadd.s32 %v499, %v497
          %vm502 = vcmp.lt.s32.totalorder %v500, 600
          %vm503 = vcmp.lt.s32.totalorder %v501, 600
          %v504 = vsel %vm502, %v493, 0.0
          %v505 = vsel %vm503, %v494, 0.0
          %506 = vmatprep.subr.mxu0 %v210
          %507 = vmatpush1.msra.mxu0 %v209
          %508 = vmatprep.subr.mxu0 %v214
          %509 = vmatpush1.msra.mxu0 %v213
          %510 = vmatprep.subr.mxu0 %v218
          %511 = vmatpush1.msra.mxu0 %v217
          %512 = vmatprep.subr.mxu0 %v222
          %513 = vmatpush1.msra.mxu0 %v221
          %514 = vmatprep.subr.mxu0 %v226
          %515 = vmatpush1.msra.mxu0 %v225
          %516 = vmatprep.subr.mxu0 %v230
          %517 = vmatpush1.msra.mxu0 %v229
          %518 = vmatprep.subr.mxu0 %v234
          %519 = vmatpush1.msra.mxu0 %v233
          %520 = vmatprep.subr.mxu0 %v238
          %521 = vmatpush1.msra.mxu0 %v237
          %522 = vmatprep.subr.mxu0 %v242
          %523 = vmatpush1.msra.mxu0 %v241
          %524 = vmatprep.subr.mxu0 %v246
          %525 = vmatpush1.msra.mxu0 %v245
          %526 = vmatprep.subr.mxu0 %v250
          %527 = vmatpush1.msra.mxu0 %v249
          %528 = vmatprep.subr.mxu0 %v254
          %529 = vmatpush1.msra.mxu0 %v253
          %530 = vmatprep.subr.mxu0 %v258
          %531 = vmatpush1.msra.mxu0 %v257
          %532 = vmatprep.subr.mxu0 %v262
          %533 = vmatpush1.msra.mxu0 %v261
          %534 = vmatprep.subr.mxu0 %v266
          %535 = vmatpush1.msra.mxu0 %v265
          %536 = vmatprep.subr.mxu0 %v270
          %537 = vmatpush1.msra.mxu0 %v269
          %538 = vmatprep.subr.mxu0 %v274
          %539 = vmatpush1.msra.mxu0 %v273
          %540 = vmatprep.subr.mxu0 %v278
          %541 = vmatpush1.msra.mxu0 %v277
          %542 = vmatprep.subr.mxu0 %v282
          %543 = vmatpush1.msra.mxu0 %v281
          %544 = vmatprep.subr.mxu0 %v286
          %545 = vmatpush1.msra.mxu0 %v285
          %546 = vmatprep.subr.mxu0 %v290
          %547 = vmatpush1.msra.mxu0 %v289
          %548 = vmatprep.subr.mxu0 %v294
          %549 = vmatpush1.msra.mxu0 %v293
          %550 = vmatprep.subr.mxu0 %v298
          %551 = vmatpush1.msra.mxu0 %v297
          %552 = vmatprep.subr.mxu0 %v302
          %553 = vmatpush1.msra.mxu0 %v301
          %554 = vmatprep.subr.mxu0 %v306
          %555 = vmatpush1.msra.mxu0 %v305
          %556 = vmatprep.subr.mxu0 %v310
          %557 = vmatpush1.msra.mxu0 %v309
          %558 = vmatprep.subr.mxu0 %v314
          %559 = vmatpush1.msra.mxu0 %v313
          %560 = vmatprep.subr.mxu0 %v318
          %561 = vmatpush1.msra.mxu0 %v317
          %562 = vmatprep.subr.mxu0 %v322
          %563 = vmatpush1.msra.mxu0 %v321
          %564 = vmatprep.subr.mxu0 %v326
          %565 = vmatpush1.msra.mxu0 %v325
          %566 = vmatprep.subr.mxu0 %v330
          %567 = vmatpush1.msra.mxu0 %v329
          %568 = vmatprep.subr.mxu0 %v334
          %569 = vmatpush1.msra.mxu0 %v333
          %570 = vmatprep.mubr.f32.mxu0 %v505
          %571 = vmatmul.mubr.f32.gmra.mrb[0].mxu0 %v504
          %v572 = vpop.f32.mrb[0].mxu0
          %v573 = vadd.f32 0.0, %v572
          %v574 = vpop.f32.mrb[0].mxu0
          %v575 = vadd.f32 0.0, %v574
          %576 = vdwg.mxu0
          %577 = vmatprep.subr.mxu0 %v212
          %578 = vmatpush1.msra.mxu0 %v211
          %579 = vmatprep.subr.mxu0 %v216
          %580 = vmatpush1.msra.mxu0 %v215
          %581 = vmatprep.subr.mxu0 %v220
          %582 = vmatpush1.msra.mxu0 %v219
          %583 = vmatprep.subr.mxu0 %v224
          %584 = vmatpush1.msra.mxu0 %v223
          %585 = vmatprep.subr.mxu0 %v228
          %586 = vmatpush1.msra.mxu0 %v227
          %587 = vmatprep.subr.mxu0 %v232
          %588 = vmatpush1.msra.mxu0 %v231
          %589 = vmatprep.subr.mxu0 %v236
          %590 = vmatpush1.msra.mxu0 %v235
          %591 = vmatprep.subr.mxu0 %v240
          %592 = vmatpush1.msra.mxu0 %v239
          %593 = vmatprep.subr.mxu0 %v244
          %594 = vmatpush1.msra.mxu0 %v243
          %595 = vmatprep.subr.mxu0 %v248
          %596 = vmatpush1.msra.mxu0 %v247
          %597 = vmatprep.subr.mxu0 %v252
          %598 = vmatpush1.msra.mxu0 %v251
          %599 = vmatprep.subr.mxu0 %v256
          %600 = vmatpush1.msra.mxu0 %v255
          %601 = vmatprep.subr.mxu0 %v260
          %602 = vmatpush1.msra.mxu0 %v259
          %603 = vmatprep.subr.mxu0 %v264
          %604 = vmatpush1.msra.mxu0 %v263
          %605 = vmatprep.subr.mxu0 %v268
          %606 = vmatpush1.msra.mxu0 %v267
          %607 = vmatprep.subr.mxu0 %v272
          %608 = vmatpush1.msra.mxu0 %v271
          %609 = vmatprep.subr.mxu0 %v276
          %610 = vmatpush1.msra.mxu0 %v275
          %611 = vmatprep.subr.mxu0 %v280
          %612 = vmatpush1.msra.mxu0 %v279
          %613 = vmatprep.subr.mxu0 %v284
          %614 = vmatpush1.msra.mxu0 %v283
          %615 = vmatprep.subr.mxu0 %v288
          %616 = vmatpush1.msra.mxu0 %v287
          %617 = vmatprep.subr.mxu0 %v292
          %618 = vmatpush1.msra.mxu0 %v291
          %619 = vmatprep.subr.mxu0 %v296
          %620 = vmatpush1.msra.mxu0 %v295
          %621 = vmatprep.subr.mxu0 %v300
          %622 = vmatpush1.msra.mxu0 %v299
          %623 = vmatprep.subr.mxu0 %v304
          %624 = vmatpush1.msra.mxu0 %v303
          %625 = vmatprep.subr.mxu0 %v308
          %626 = vmatpush1.msra.mxu0 %v307
          %627 = vmatprep.subr.mxu0 %v312
          %628 = vmatpush1.msra.mxu0 %v311
          %629 = vmatprep.subr.mxu0 %v316
          %630 = vmatpush1.msra.mxu0 %v315
          %631 = vmatprep.subr.mxu0 %v320
          %632 = vmatpush1.msra.mxu0 %v319
          %633 = vmatprep.subr.mxu0 %v324
          %634 = vmatpush1.msra.mxu0 %v323
          %635 = vmatprep.subr.mxu0 %v328
          %636 = vmatpush1.msra.mxu0 %v327
          %637 = vmatprep.subr.mxu0 %v332
          %638 = vmatpush1.msra.mxu0 %v331
          %639 = vmatprep.subr.mxu0 %v336
          %640 = vmatpush1.msra.mxu0 %v335
          %641 = vmatprep.mubr.f32.mxu0 %v505
          %642 = vmatmul.mubr.f32.gmra.mrb[0].mxu0 %v504
          %v643 = vpop.f32.mrb[0].mxu0
          %v644 = vadd.f32 0.0, %v643
          %v645 = vpop.f32.mrb[0].mxu0
          %v646 = vadd.f32 0.0, %v645
          %647 = vdwg.mxu0
          %648 = vst [vmem:[%s198] sm:$0xff] %v573
          %649 = vst [vmem:[%s198 + $0x8] sm:$0xff] %v575
          %650 = vst [vmem:[%s198 + $0x10] sm:$0xff] %v644
          %651 = vst [vmem:[%s198 + $0x18] sm:$0xff] %v646
        $region44: #{tpu_custom_call.1} parent=27 // pred_fallthru
          _
        %s652 = sand.u32 %s91, 1
        %s653 = scalar_lea.sflag [#allocation4], %s652
        %s654 = sand.u32 %s91, 1
        %s655 = smul.addr %s654, 32
        %s656 = scalar_lea.vmem [#allocation7], %s655
        // Predicated region
        $region45: #{tpu_custom_call.1} parent=27 // pred_check
          %p657 = pneg %p101
        $region46: #{tpu_custom_call.1} parent=27 // pred_check_branch
          %659 = sbr.rel (%p657) target = $region48
        $region47: #{tpu_custom_call.1} parent=27 // pred_region
          %s660 = smul.u32 4, %s25
          %s661 = ssub.s32 10, %s660
          %p662 = scmp.lt.s32.totalorder %s661, 4
          %s663 = scalar_select %p662, %s661, 4
          %s664 = smul.u32 128, %s663
          %s666 = ssub.s32 512, %s664
          %667 = vsyncadd %s653, %s666
          %p668 = scmp.ne.s32.totalorder 0, %s664
          %s669 = smul.addr %s24, 10
          %s670 = sadd.s32 %s660, %s669
          %s671 = smul.addr %s670, 128
          %s672 = scalar_lea.hbm %s2, %s671
          %s673 = smul.u32 %s663, 8
          %s674 = sshll.u32 %s673, 4
          %s675 = sshll.u32 %s656, 4
          %s676 = int_to_ptr.vmem [resolvable:$true] %s675
          %678 = dma.vmem_to_hbm [thread:$0]  (%p668), %s676, %s674, %s672, %s653
        $region48: #{tpu_custom_call.1} parent=27 // pred_fallthru
          _
      $region28: #{tpu_custom_call.1} parent=5 // pred_fallthru
        _
      %p679 = scmp.le.s32.totalorder 2, %s15
      // Predicated region
      $region49: #{tpu_custom_call.1} parent=5 // pred_check
        %p680 = pneg %p679
      $region50: #{tpu_custom_call.1} parent=5 // pred_check_branch
        %682 = sbr.rel (%p680) target = $region52
      $region51: #{tpu_custom_call.1} parent=5 // pred_region
        %s683 = ssub.s32 %s15, 2
        // Predicated region
        $region53: #{tpu_custom_call.1} parent=51 // pred_check
          %p684 = pneg %p107
        $region54: #{tpu_custom_call.1} parent=51 // pred_check_branch
          %686 = sbr.rel (%p684) target = $region56
        $region55: #{tpu_custom_call.1} parent=51 // pred_region
          %s687 = sand.u32 %s92, 1
          %s688 = scalar_lea.sflag [#allocation4], %s687
          %s689 = sand.u32 %s92, 1
          %s690 = smul.addr %s689, 32
          %s691 = scalar_lea.vmem [#allocation7], %s690
          %692 = dma.done %s688, 512
        $region56: #{tpu_custom_call.1} parent=51 // pred_fallthru
          _
      $region52: #{tpu_custom_call.1} parent=5 // pred_fallthru
        _
    $region6: #{tpu_custom_call.1} parent=1 // loop_footer
      %s19 = sadd.s32 1, %s15
    $region7: #{tpu_custom_call.1} parent=1 // loop_footer_branch
      %14 = sbr.rel target = $region3
    $region8: #{tpu_custom_call.1} parent=1 // loop_exit
      _
    %693 = vsyncpa [#allocation3], 1
    %s694 = scalar_lea.sflag [#allocation3], 1
    %695 = vsyncpa %s694, 1
    %696 = vsyncpa [#allocation6], 1
    %697 = vsyncpa [#allocation4], 1
    %s698 = scalar_lea.sflag [#allocation4], 1
    %699 = vsyncpa %s698, 1

// kernel: tpu_custom_call.1
$region0: #{tpu_custom_call.1}
  #allocation0 [shape = 'u32[]', space=smem, size = 0x4, offset = 0x4, fixed_abs, tag = 'smem constant byte address 0x4 - core index']
  #allocation1 [shape = 'u32[144,128]{1,0:T(1,128)}', space=vmem, size = 0x12000, scoped, tag = 'internal scratch']
  %s0 = inlined_call_operand.hbm [shape: f32[16,600], index: 0, kind: input, shape index: {}]
  %s1 = inlined_call_operand.hbm [shape: f32[256,512], index: 1, kind: input, shape index: {}]
  %s2 = inlined_call_operand.hbm [shape: f32[16,1200], index: 2, kind: output, shape index: {}]
  %s3 = sld [smem:[#allocation0]]
  $region57: #{tpu_custom_call.1} parent=0
    _
  %s5 = ssub.s32 1, %s3
  %s6 = scalar_select 0, %s5, %s3
  $region1: #{tpu_custom_call.1} parent=0
    #allocation2 [shape = 'u8[16384]{0}', space=vmem, size = 0x4000, scoped, tag = 'input window, operand 0']
    #allocation3 [shape = 's32[2]{0}', space=sflag, size = 0x8, scoped, tag = 'scoped memory for tpu_custom_call.1']
    #allocation4 [shape = 's32[2]{0}', space=sflag, size = 0x8, scoped, tag = 'scoped memory for tpu_custom_call.1']
    #allocation5 [shape = 'u8[524288]{0}', space=vmem, size = 0x80000, scoped, tag = 'input window, operand 1, single buffered']
    #allocation6 [shape = 's32[1]{0}', space=sflag, size = 0x4, scoped, tag = 'scoped memory for tpu_custom_call.1']
    #allocation7 [shape = 'u8[32768]{0}', space=vmem, size = 0x8000, scoped, tag = 'output window, operand 0']
    %7 = vsyncpa [#allocation3], 0
    %s8 = scalar_lea.sflag [#allocation3], 1
    %9 = vsyncpa %s8, 0
    %10 = vsyncpa [#allocation6], 0
    %11 = vsyncpa [#allocation4], 0
    %s12 = scalar_lea.sflag [#allocation4], 1
    %13 = vsyncpa %s12, 0
    loop: start=0, step=1, limit=8
    $region2: #{tpu_custom_call.1} parent=1 // loop_pre_header
      _
    $region3: #{tpu_custom_call.1} parent=1 // loop_header
      %s15 = sphi 0, %s19
      %p16 = scmp.ge.s32.totalorder %s15, 8
      %s22 = sphi 0, %s34
      %s23 = sphi 0, %s30
      %s24 = sphi 0, %s22
      %s25 = sphi 0, %s23
      %s26 = sphi 0, %s24
      %s27 = sphi 0, %s25
      %s39 = sphi 0, %s41
      %s42 = sphi 0, %s39
      %s43 = sphi 0, %s42
      %s59 = sphi 0, %s43
      %s63 = sphi 0, %s63
      %s65 = sphi 0, %s63
      %s66 = sphi 0, %s65
      %s80 = sphi 0, %s66
      %s88 = sphi 0, %s90
      %s91 = sphi 0, %s88
      %s92 = sphi 0, %s91
      %s108 = sphi 0, %s92
    $region4: #{tpu_custom_call.1} parent=1 // loop_header_branch
      %18 = sbr.rel (%p16) target = $region8
    $region5: #{tpu_custom_call.1} parent=1 // loop_body
      %s20 = ssub.s32 %s15, 1
      %s21 = ssub.s32 %s15, 2
      %s28 = sadd.s32 1, %s23
      %p29 = scmp.ge.s32.totalorder %s28, 3
      %s30 = scalar_select %p29, 0, %s28
      %s31 = sadd.s32 1, %s22
      %s32 = scalar_select %p29, %s31, %s22
      %p33 = scmp.ge.s32.totalorder %s32, 2
      %s34 = scalar_select %p33, 0, %s32
      %s35 = ssub.s32 %s22, %s34
      %s36 = ssub.s32 %s23, %s30
      %s37 = sor.u32 %s35, %s36
      %p38 = scmp.eq.s32.totalorder %s37, 0
      %s40 = sadd.s32 %s39, 1
      %s41 = scalar_select %p38, %s39, %s40
      %p44 = pneg %p38
      %p45 = scmp.eq.s32.totalorder %s15, 5
      %p46 = por %p44, %p45
      %p47 = scmp.ne.s32.totalorder %s39, %s42
      %p48 = scmp.eq.s32.totalorder %s15, 0
      %p49 = por %p47, %p48
      %p50 = scmp.ne.s32.totalorder %s39, %s42
      %p51 = scmp.eq.s32.totalorder %s20, 5
      %p52 = por %p50, %p51
      %p53 = scmp.ne.s32.totalorder %s42, %s43
      %p54 = scmp.eq.s32.totalorder %s20, 0
      %p55 = por %p53, %p54
      %p56 = scmp.ne.s32.totalorder %s42, %s43
      %p57 = scmp.eq.s32.totalorder %s21, 5
      %p58 = por %p56, %p57
      %p60 = scmp.ne.s32.totalorder %s43, %s59
      %p61 = scmp.eq.s32.totalorder %s21, 0
      %p62 = por %p60, %p61
      %s64 = sadd.s32 %s63, 1
      %p67 = scmp.eq.s32.totalorder %s15, 5
      %p68 = scmp.ne.s32.totalorder %s63, %s65
      %p69 = scmp.eq.s32.totalorder %s15, 0
      %p70 = por %p68, %p69
      %p71 = scmp.ne.s32.totalorder %s63, %s65
      %p72 = scmp.eq.s32.totalorder %s20, 5
      %p73 = por %p71, %p72
      %p74 = scmp.ne.s32.totalorder %s65, %s66
      %p75 = scmp.eq.s32.totalorder %s20, 0
      %p76 = por %p74, %p75
      %p77 = scmp.ne.s32.totalorder %s65, %s66
      %p78 = scmp.eq.s32.totalorder %s21, 5
      %p79 = por %p77, %p78
      %p81 = scmp.ne.s32.totalorder %s66, %s80
      %p82 = scmp.eq.s32.totalorder %s21, 0
      %p83 = por %p81, %p82
      %s84 = ssub.s32 %s22, %s34
      %s85 = ssub.s32 %s23, %s30
      %s86 = sor.u32 %s84, %s85
      %p87 = scmp.eq.s32.totalorder %s86, 0
      %s89 = sadd.s32 %s88, 1
      %s90 = scalar_select %p87, %s88, %s89
      %p93 = pneg %p87
      %p94 = scmp.eq.s32.totalorder %s15, 5
      %p95 = por %p93, %p94
      %p96 = scmp.ne.s32.totalorder %s88, %s91
      %p97 = scmp.eq.s32.totalorder %s15, 0
      %p98 = por %p96, %p97
      %p99 = scmp.ne.s32.totalorder %s88, %s91
      %p100 = scmp.eq.s32.totalorder %s20, 5
      %p101 = por %p99, %p100
      %p102 = scmp.ne.s32.totalorder %s91, %s92
      %p103 = scmp.eq.s32.totalorder %s20, 0
      %p104 = por %p102, %p103
      %p105 = scmp.ne.s32.totalorder %s91, %s92
      %p106 = scmp.eq.s32.totalorder %s21, 5
      %p107 = por %p105, %p106
      %p109 = scmp.ne.s32.totalorder %s92, %s108
      %p110 = scmp.eq.s32.totalorder %s21, 0
      %p111 = por %p109, %p110
      %p112 = scmp.le.s32.totalorder 1, %s15
      %p113 = scmp.lt.s32.totalorder %s15, 7
      %p114 = pnand %p112, %p113
      %p115 = pneg %p114
      // Predicated region
      $region9: #{tpu_custom_call.1} parent=5 // pred_check
        _
      $region10: #{tpu_custom_call.1} parent=5 // pred_check_branch
        %117 = sbr.rel (%p114) target = $region12
      $region11: #{tpu_custom_call.1} parent=5 // pred_region
        %s118 = ssub.s32 %s15, 1
        // Predicated region
        $region13: #{tpu_custom_call.1} parent=11 // pred_check
          %p119 = pneg %p76
        $region14: #{tpu_custom_call.1} parent=11 // pred_check_branch
          %121 = sbr.rel (%p119) target = $region16
        $region15: #{tpu_custom_call.1} parent=11 // pred_region
          %s123 = ssub.s32 16384, 16384
          %124 = vsyncadd [#allocation6], %s123
          %s125 = sshll.u32 [#allocation5], 4
          %s126 = int_to_ptr.vmem [resolvable:$true] %s125
          %131 = dma.hbm_to_vmem [thread:$0]  %s1, 16384, %s126, [#allocation6], 512, 512, 32
        $region16: #{tpu_custom_call.1} parent=11 // pred_fallthru
          _
      $region12: #{tpu_custom_call.1} parent=5 // pred_fallthru
        _
      %p132 = scmp.lt.s32.totalorder %s15, 6
      // Predicated region
      $region17: #{tpu_custom_call.1} parent=5 // pred_check
        %p133 = pneg %p132
      $region18: #{tpu_custom_call.1} parent=5 // pred_check_branch
        %135 = sbr.rel (%p133) target = $region20
      $region19: #{tpu_custom_call.1} parent=5 // pred_region
        // Predicated region
        $region21: #{tpu_custom_call.1} parent=19 // pred_check
          %p136 = pneg %p49
        $region22: #{tpu_custom_call.1} parent=19 // pred_check_branch
          %138 = sbr.rel (%p136) target = $region24
        $region23: #{tpu_custom_call.1} parent=19 // pred_region
          %s139 = sand.u32 %s39, 1
          %s140 = scalar_lea.sflag [#allocation3], %s139
          %s141 = sand.u32 %s39, 1
          %s142 = smul.addr %s141, 16
          %s143 = scalar_lea.vmem [#allocation2], %s142
          %s144 = smul.u32 2, %s23
          %s145 = ssub.s32 5, %s144
          %p146 = scmp.lt.s32.totalorder %s145, 2
          %s147 = scalar_select %p146, %s145, 2
          %s148 = smul.u32 128, %s147
          %s150 = ssub.s32 256, %s148
          %151 = vsyncadd %s140, %s150
          %p152 = scmp.ne.s32.totalorder 0, %s148
          %s153 = smul.addr %s22, 5
          %s154 = sadd.s32 %s144, %s153
          %s155 = smul.addr %s154, 128
          %s156 = scalar_lea.hbm %s0, %s155
          %s157 = smul.u32 %s147, 8
          %s158 = sshll.u32 %s157, 4
          %s159 = sshll.u32 %s143, 4
          %s160 = int_to_ptr.vmem [resolvable:$true] %s159
          %162 = dma.hbm_to_vmem [thread:$0]  (%p152), %s156, %s158, %s160, %s140
        $region24: #{tpu_custom_call.1} parent=19 // pred_fallthru
          _
      $region20: #{tpu_custom_call.1} parent=5 // pred_fallthru
        _
      %p163 = scmp.le.s32.totalorder 1, %s15
      %p164 = scmp.lt.s32.totalorder %s15, 7
      %p165 = pnand %p163, %p164
      %p166 = pneg %p165
      // Predicated region
      $region25: #{tpu_custom_call.1} parent=5 // pred_check
        _
      $region26: #{tpu_custom_call.1} parent=5 // pred_check_branch
        %168 = sbr.rel (%p165) target = $region28
      $region27: #{tpu_custom_call.1} parent=5 // pred_region
        %s169 = ssub.s32 %s15, 1
        %s170 = sand.u32 %s42, 1
        %s171 = scalar_lea.sflag [#allocation3], %s170
        %s172 = sand.u32 %s42, 1
        %s173 = smul.addr %s172, 16
        %s174 = scalar_lea.vmem [#allocation2], %s173
        // Predicated region
        $region29: #{tpu_custom_call.1} parent=27 // pred_check
          %p175 = pneg %p55
        $region30: #{tpu_custom_call.1} parent=27 // pred_check_branch
          %177 = sbr.rel (%p175) target = $region32
        $region31: #{tpu_custom_call.1} parent=27 // pred_region
          %178 = dma.done %s171, 256
        $region32: #{tpu_custom_call.1} parent=27 // pred_fallthru
          _
        // Predicated region
        $region33: #{tpu_custom_call.1} parent=27 // pred_check
          %p179 = pneg %p76
        $region34: #{tpu_custom_call.1} parent=27 // pred_check_branch
          %181 = sbr.rel (%p179) target = $region36
        $region35: #{tpu_custom_call.1} parent=27 // pred_region
          %182 = dma.done [#allocation6], 16384
        $region36: #{tpu_custom_call.1} parent=27 // pred_fallthru
          _
        %s183 = sand.u32 %s42, 1
        %s184 = scalar_lea.sflag [#allocation3], %s183
        %s185 = sand.u32 %s42, 1
        %s186 = smul.addr %s185, 16
        %s187 = scalar_lea.vmem [#allocation2], %s186
        %p188 = pneg %p55
        %p189 = pneg %p52
        %p190 = pneg %p76
        %p191 = pneg %p73
        %p192 = pneg %p104
        %p193 = pneg %p101
        %s194 = sand.u32 %s91, 1
        %s195 = scalar_lea.sflag [#allocation4], %s194
        %s196 = sand.u32 %s91, 1
        %s197 = smul.addr %s196, 32
        %s198 = scalar_lea.vmem [#allocation7], %s197
        %s199 = smul.u32 2, %s25
        %s200 = ssub.s32 5, %s199
        %p201 = scmp.lt.s32.totalorder %s200, 2
        %s202 = scalar_select %p201, %s200, 2
        %s203 = smul.u32 128, %s202
        %s204 = smul.u32 4, %s25
        %s205 = ssub.s32 10, %s204
        %p206 = scmp.lt.s32.totalorder %s205, 4
        %s207 = scalar_select %p206, %s205, 4
        %s208 = smul.u32 128, %s207
        %v209 = vld [vmem:[#allocation5] sm:$0xff]
        %v210 = vld [vmem:[#allocation5 + $0x8] sm:$0xff]
        %v211 = vld [vmem:[#allocation5 + $0x10] sm:$0xff]
        %v212 = vld [vmem:[#allocation5 + $0x18] sm:$0xff]
        %v213 = vld [vmem:[#allocation5 + $0x20] sm:$0xff]
        %v214 = vld [vmem:[#allocation5 + $0x28] sm:$0xff]
        %v215 = vld [vmem:[#allocation5 + $0x30] sm:$0xff]
        %v216 = vld [vmem:[#allocation5 + $0x38] sm:$0xff]
        %v217 = vld [vmem:[#allocation5 + $0x40] sm:$0xff]
        %v218 = vld [vmem:[#allocation5 + $0x48] sm:$0xff]
        %v219 = vld [vmem:[#allocation5 + $0x50] sm:$0xff]
        %v220 = vld [vmem:[#allocation5 + $0x58] sm:$0xff]
        %v221 = vld [vmem:[#allocation5 + $0x60] sm:$0xff]
        %v222 = vld [vmem:[#allocation5 + $0x68] sm:$0xff]
        %v223 = vld [vmem:[#allocation5 + $0x70] sm:$0xff]
        %v224 = vld [vmem:[#allocation5 + $0x78] sm:$0xff]
        %v225 = vld [vmem:[#allocation5 + $0x80] sm:$0xff]
        %v226 = vld [vmem:[#allocation5 + $0x88] sm:$0xff]
        %v227 = vld [vmem:[#allocation5 + $0x90] sm:$0xff]
        %v228 = vld [vmem:[#allocation5 + $0x98] sm:$0xff]
        %v229 = vld [vmem:[#allocation5 + $0xa0] sm:$0xff]
        %v230 = vld [vmem:[#allocation5 + $0xa8] sm:$0xff]
        %v231 = vld [vmem:[#allocation5 + $0xb0] sm:$0xff]
        %v232 = vld [vmem:[#allocation5 + $0xb8] sm:$0xff]
        %v233 = vld [vmem:[#allocation5 + $0xc0] sm:$0xff]
        %v234 = vld [vmem:[#allocation5 + $0xc8] sm:$0xff]
        %v235 = vld [vmem:[#allocation5 + $0xd0] sm:$0xff]
        %v236 = vld [vmem:[#allocation5 + $0xd8] sm:$0xff]
        %v237 = vld [vmem:[#allocation5 + $0xe0] sm:$0xff]
        %v238 = vld [vmem:[#allocation5 + $0xe8] sm:$0xff]
        %v239 = vld [vmem:[#allocation5 + $0xf0] sm:$0xff]
        %v240 = vld [vmem:[#allocation5 + $0xf8] sm:$0xff]
        %v241 = vld [vmem:[#allocation5 + $0x100] sm:$0xff]
        %v242 = vld [vmem:[#allocation5 + $0x108] sm:$0xff]
        %v243 = vld [vmem:[#allocation5 + $0x110] sm:$0xff]
        %v244 = vld [vmem:[#allocation5 + $0x118] sm:$0xff]
        %v245 = vld [vmem:[#allocation5 + $0x120] sm:$0xff]
        %v246 = vld [vmem:[#allocation5 + $0x128] sm:$0xff]
        %v247 = vld [vmem:[#allocation5 + $0x130] sm:$0xff]
        %v248 = vld [vmem:[#allocation5 + $0x138] sm:$0xff]
        %v249 = vld [vmem:[#allocation5 + $0x140] sm:$0xff]
        %v250 = vld [vmem:[#allocation5 + $0x148] sm:$0xff]
        %v251 = vld [vmem:[#allocation5 + $0x150] sm:$0xff]
        %v252 = vld [vmem:[#allocation5 + $0x158] sm:$0xff]
        %v253 = vld [vmem:[#allocation5 + $0x160] sm:$0xff]
        %v254 = vld [vmem:[#allocation5 + $0x168] sm:$0xff]
        %v255 = vld [vmem:[#allocation5 + $0x170] sm:$0xff]
        %v256 = vld [vmem:[#allocation5 + $0x178] sm:$0xff]
        %v257 = vld [vmem:[#allocation5 + $0x180] sm:$0xff]
        %v258 = vld [vmem:[#allocation5 + $0x188] sm:$0xff]
        %v259 = vld [vmem:[#allocation5 + $0x190] sm:$0xff]
        %v260 = vld [vmem:[#allocation5 + $0x198] sm:$0xff]
        %v261 = vld [vmem:[#allocation5 + $0x1a0] sm:$0xff]
        %v262 = vld [vmem:[#allocation5 + $0x1a8] sm:$0xff]
        %v263 = vld [vmem:[#allocation5 + $0x1b0] sm:$0xff]
        %v264 = vld [vmem:[#allocation5 + $0x1b8] sm:$0xff]
        %v265 = vld [vmem:[#allocation5 + $0x1c0] sm:$0xff]
        %v266 = vld [vmem:[#allocation5 + $0x1c8] sm:$0xff]
        %v267 = vld [vmem:[#allocation5 + $0x1d0] sm:$0xff]
        %v268 = vld [vmem:[#allocation5 + $0x1d8] sm:$0xff]
        %v269 = vld [vmem:[#allocation5 + $0x1e0] sm:$0xff]
        %v270 = vld [vmem:[#allocation5 + $0x1e8] sm:$0xff]
        %v271 = vld [vmem:[#allocation5 + $0x1f0] sm:$0xff]
        %v272 = vld [vmem:[#allocation5 + $0x1f8] sm:$0xff]
        %v273 = vld [vmem:[#allocation5 + $0x200] sm:$0xff]
        %v274 = vld [vmem:[#allocation5 + $0x208] sm:$0xff]
        %v275 = vld [vmem:[#allocation5 + $0x210] sm:$0xff]
        %v276 = vld [vmem:[#allocation5 + $0x218] sm:$0xff]
        %v277 = vld [vmem:[#allocation5 + $0x220] sm:$0xff]
        %v278 = vld [vmem:[#allocation5 + $0x228] sm:$0xff]
        %v279 = vld [vmem:[#allocation5 + $0x230] sm:$0xff]
        %v280 = vld [vmem:[#allocation5 + $0x238] sm:$0xff]
        %v281 = vld [vmem:[#allocation5 + $0x240] sm:$0xff]
        %v282 = vld [vmem:[#allocation5 + $0x248] sm:$0xff]
        %v283 = vld [vmem:[#allocation5 + $0x250] sm:$0xff]
        %v284 = vld [vmem:[#allocation5 + $0x258] sm:$0xff]
        %v285 = vld [vmem:[#allocation5 + $0x260] sm:$0xff]
        %v286 = vld [vmem:[#allocation5 + $0x268] sm:$0xff]
        %v287 = vld [vmem:[#allocation5 + $0x270] sm:$0xff]
        %v288 = vld [vmem:[#allocation5 + $0x278] sm:$0xff]
        %v289 = vld [vmem:[#allocation5 + $0x280] sm:$0xff]
        %v290 = vld [vmem:[#allocation5 + $0x288] sm:$0xff]
        %v291 = vld [vmem:[#allocation5 + $0x290] sm:$0xff]
        %v292 = vld [vmem:[#allocation5 + $0x298] sm:$0xff]
        %v293 = vld [vmem:[#allocation5 + $0x2a0] sm:$0xff]
        %v294 = vld [vmem:[#allocation5 + $0x2a8] sm:$0xff]
        %v295 = vld [vmem:[#allocation5 + $0x2b0] sm:$0xff]
        %v296 = vld [vmem:[#allocation5 + $0x2b8] sm:$0xff]
        %v297 = vld [vmem:[#allocation5 + $0x2c0] sm:$0xff]
        %v298 = vld [vmem:[#allocation5 + $0x2c8] sm:$0xff]
        %v299 = vld [vmem:[#allocation5 + $0x2d0] sm:$0xff]
        %v300 = vld [vmem:[#allocation5 + $0x2d8] sm:$0xff]
        %v301 = vld [vmem:[#allocation5 + $0x2e0] sm:$0xff]
        %v302 = vld [vmem:[#allocation5 + $0x2e8] sm:$0xff]
        %v303 = vld [vmem:[#allocation5 + $0x2f0] sm:$0xff]
        %v304 = vld [vmem:[#allocation5 + $0x2f8] sm:$0xff]
        %v305 = vld [vmem:[#allocation5 + $0x300] sm:$0xff]
        %v306 = vld [vmem:[#allocation5 + $0x308] sm:$0xff]
        %v307 = vld [vmem:[#allocation5 + $0x310] sm:$0xff]
        %v308 = vld [vmem:[#allocation5 + $0x318] sm:$0xff]
        %v309 = vld [vmem:[#allocation5 + $0x320] sm:$0xff]
        %v310 = vld [vmem:[#allocation5 + $0x328] sm:$0xff]
        %v311 = vld [vmem:[#allocation5 + $0x330] sm:$0xff]
        %v312 = vld [vmem:[#allocation5 + $0x338] sm:$0xff]
        %v313 = vld [vmem:[#allocation5 + $0x340] sm:$0xff]
        %v314 = vld [vmem:[#allocation5 + $0x348] sm:$0xff]
        %v315 = vld [vmem:[#allocation5 + $0x350] sm:$0xff]
        %v316 = vld [vmem:[#allocation5 + $0x358] sm:$0xff]
        %v317 = vld [vmem:[#allocation5 + $0x360] sm:$0xff]
        %v318 = vld [vmem:[#allocation5 + $0x368] sm:$0xff]
        %v319 = vld [vmem:[#allocation5 + $0x370] sm:$0xff]
        %v320 = vld [vmem:[#allocation5 + $0x378] sm:$0xff]
        %v321 = vld [vmem:[#allocation5 + $0x380] sm:$0xff]
        %v322 = vld [vmem:[#allocation5 + $0x388] sm:$0xff]
        %v323 = vld [vmem:[#allocation5 + $0x390] sm:$0xff]
        %v324 = vld [vmem:[#allocation5 + $0x398] sm:$0xff]
        %v325 = vld [vmem:[#allocation5 + $0x3a0] sm:$0xff]
        %v326 = vld [vmem:[#allocation5 + $0x3a8] sm:$0xff]
        %v327 = vld [vmem:[#allocation5 + $0x3b0] sm:$0xff]
        %v328 = vld [vmem:[#allocation5 + $0x3b8] sm:$0xff]
        %v329 = vld [vmem:[#allocation5 + $0x3c0] sm:$0xff]
        %v330 = vld [vmem:[#allocation5 + $0x3c8] sm:$0xff]
        %v331 = vld [vmem:[#allocation5 + $0x3d0] sm:$0xff]
        %v332 = vld [vmem:[#allocation5 + $0x3d8] sm:$0xff]
        %v333 = vld [vmem:[#allocation5 + $0x3e0] sm:$0xff]
        %v334 = vld [vmem:[#allocation5 + $0x3e8] sm:$0xff]
        %v335 = vld [vmem:[#allocation5 + $0x3f0] sm:$0xff]
        %v336 = vld [vmem:[#allocation5 + $0x3f8] sm:$0xff]
        %p337 = scmp.ne.s32.totalorder %s25, 2
        // Predicated region
        $region37: #{tpu_custom_call.1} parent=27 // pred_check
          %p338 = pneg %p337
        $region38: #{tpu_custom_call.1} parent=27 // pred_check_branch
          %340 = sbr.rel (%p338) target = $region40
        $region39: #{tpu_custom_call.1} parent=27 // pred_region
          %v341 = vld [vmem:[%s174] sm:$0xff]
          %v342 = vld [vmem:[%s174 + $0x8] sm:$0xff]
          %343 = vmatprep.subr.mxu0 %v210
          %344 = vmatpush1.msra.mxu0 %v209
          %345 = vmatprep.subr.mxu0 %v214
          %346 = vmatpush1.msra.mxu0 %v213
          %347 = vmatprep.subr.mxu0 %v218
          %348 = vmatpush1.msra.mxu0 %v217
          %349 = vmatprep.subr.mxu0 %v222
          %350 = vmatpush1.msra.mxu0 %v221
          %351 = vmatprep.subr.mxu0 %v226
          %352 = vmatpush1.msra.mxu0 %v225
          %353 = vmatprep.subr.mxu0 %v230
          %354 = vmatpush1.msra.mxu0 %v229
          %355 = vmatprep.subr.mxu0 %v234
          %356 = vmatpush1.msra.mxu0 %v233
          %357 = vmatprep.subr.mxu0 %v238
          %358 = vmatpush1.msra.mxu0 %v237
          %359 = vmatprep.subr.mxu0 %v242
          %360 = vmatpush1.msra.mxu0 %v241
          %361 = vmatprep.subr.mxu0 %v246
          %362 = vmatpush1.msra.mxu0 %v245
          %363 = vmatprep.subr.mxu0 %v250
          %364 = vmatpush1.msra.mxu0 %v249
          %365 = vmatprep.subr.mxu0 %v254
          %366 = vmatpush1.msra.mxu0 %v253
          %367 = vmatprep.subr.mxu0 %v258
          %368 = vmatpush1.msra.mxu0 %v257
          %369 = vmatprep.subr.mxu0 %v262
          %370 = vmatpush1.msra.mxu0 %v261
          %371 = vmatprep.subr.mxu0 %v266
          %372 = vmatpush1.msra.mxu0 %v265
          %373 = vmatprep.subr.mxu0 %v270
          %374 = vmatpush1.msra.mxu0 %v269
          %375 = vmatprep.subr.mxu0 %v274
          %376 = vmatpush1.msra.mxu0 %v273
          %377 = vmatprep.subr.mxu0 %v278
          %378 = vmatpush1.msra.mxu0 %v277
          %379 = vmatprep.subr.mxu0 %v282
          %380 = vmatpush1.msra.mxu0 %v281
          %381 = vmatprep.subr.mxu0 %v286
          %382 = vmatpush1.msra.mxu0 %v285
          %383 = vmatprep.subr.mxu0 %v290
          %384 = vmatpush1.msra.mxu0 %v289
          %385 = vmatprep.subr.mxu0 %v294
          %386 = vmatpush1.msra.mxu0 %v293
          %387 = vmatprep.subr.mxu0 %v298
          %388 = vmatpush1.msra.mxu0 %v297
          %389 = vmatprep.subr.mxu0 %v302
          %390 = vmatpush1.msra.mxu0 %v301
          %391 = vmatprep.subr.mxu0 %v306
          %392 = vmatpush1.msra.mxu0 %v305
          %393 = vmatprep.subr.mxu0 %v310
          %394 = vmatpush1.msra.mxu0 %v309
          %395 = vmatprep.subr.mxu0 %v314
          %396 = vmatpush1.msra.mxu0 %v313
          %397 = vmatprep.subr.mxu0 %v318
          %398 = vmatpush1.msra.mxu0 %v317
          %399 = vmatprep.subr.mxu0 %v322
          %400 = vmatpush1.msra.mxu0 %v321
          %401 = vmatprep.subr.mxu0 %v326
          %402 = vmatpush1.msra.mxu0 %v325
          %403 = vmatprep.subr.mxu0 %v330
          %404 = vmatpush1.msra.mxu0 %v329
          %405 = vmatprep.subr.mxu0 %v334
          %406 = vmatpush1.msra.mxu0 %v333
          %407 = vmatprep.mubr.f32.mxu0 %v342
          %408 = vmatmul.mubr.f32.gmra.mrb[0].mxu0 %v341
          %v409 = vpop.f32.mrb[0].mxu0
          %v410 = vadd.f32 0.0, %v409
          %v411 = vpop.f32.mrb[0].mxu0
          %v412 = vadd.f32 0.0, %v411
          %413 = vdwg.mxu0
          %414 = vmatprep.subr.mxu0 %v212
          %415 = vmatpush1.msra.mxu0 %v211
          %416 = vmatprep.subr.mxu0 %v216
          %417 = vmatpush1.msra.mxu0 %v215
          %418 = vmatprep.subr.mxu0 %v220
          %419 = vmatpush1.msra.mxu0 %v219
          %420 = vmatprep.subr.mxu0 %v224
          %421 = vmatpush1.msra.mxu0 %v223
          %422 = vmatprep.subr.mxu0 %v228
          %423 = vmatpush1.msra.mxu0 %v227
          %424 = vmatprep.subr.mxu0 %v232
          %425 = vmatpush1.msra.mxu0 %v231
          %426 = vmatprep.subr.mxu0 %v236
          %427 = vmatpush1.msra.mxu0 %v235
          %428 = vmatprep.subr.mxu0 %v240
          %429 = vmatpush1.msra.mxu0 %v239
          %430 = vmatprep.subr.mxu0 %v244
          %431 = vmatpush1.msra.mxu0 %v243
          %432 = vmatprep.subr.mxu0 %v248
          %433 = vmatpush1.msra.mxu0 %v247
          %434 = vmatprep.subr.mxu0 %v252
          %435 = vmatpush1.msra.mxu0 %v251
          %436 = vmatprep.subr.mxu0 %v256
          %437 = vmatpush1.msra.mxu0 %v255
          %438 = vmatprep.subr.mxu0 %v260
          %439 = vmatpush1.msra.mxu0 %v259
          %440 = vmatprep.subr.mxu0 %v264
          %441 = vmatpush1.msra.mxu0 %v263
          %442 = vmatprep.subr.mxu0 %v268
          %443 = vmatpush1.msra.mxu0 %v267
          %444 = vmatprep.subr.mxu0 %v272
          %445 = vmatpush1.msra.mxu0 %v271
          %446 = vmatprep.subr.mxu0 %v276
          %447 = vmatpush1.msra.mxu0 %v275
          %448 = vmatprep.subr.mxu0 %v280
          %449 = vmatpush1.msra.mxu0 %v279
          %450 = vmatprep.subr.mxu0 %v284
          %451 = vmatpush1.msra.mxu0 %v283
          %452 = vmatprep.subr.mxu0 %v288
          %453 = vmatpush1.msra.mxu0 %v287
          %454 = vmatprep.subr.mxu0 %v292
          %455 = vmatpush1.msra.mxu0 %v291
          %456 = vmatprep.subr.mxu0 %v296
          %457 = vmatpush1.msra.mxu0 %v295
          %458 = vmatprep.subr.mxu0 %v300
          %459 = vmatpush1.msra.mxu0 %v299
          %460 = vmatprep.subr.mxu0 %v304
          %461 = vmatpush1.msra.mxu0 %v303
          %462 = vmatprep.subr.mxu0 %v308
          %463 = vmatpush1.msra.mxu0 %v307
          %464 = vmatprep.subr.mxu0 %v312
          %465 = vmatpush1.msra.mxu0 %v311
          %466 = vmatprep.subr.mxu0 %v316
          %467 = vmatpush1.msra.mxu0 %v315
          %468 = vmatprep.subr.mxu0 %v320
          %469 = vmatpush1.msra.mxu0 %v319
          %470 = vmatprep.subr.mxu0 %v324
          %471 = vmatpush1.msra.mxu0 %v323
          %472 = vmatprep.subr.mxu0 %v328
          %473 = vmatpush1.msra.mxu0 %v327
          %474 = vmatprep.subr.mxu0 %v332
          %475 = vmatpush1.msra.mxu0 %v331
          %476 = vmatprep.subr.mxu0 %v336
          %477 = vmatpush1.msra.mxu0 %v335
          %478 = vmatprep.mubr.f32.mxu0 %v342
          %479 = vmatmul.mubr.f32.gmra.mrb[0].mxu0 %v341
          %v480 = vpop.f32.mrb[0].mxu0
          %v481 = vadd.f32 0.0, %v480
          %v482 = vpop.f32.mrb[0].mxu0
          %v483 = vadd.f32 0.0, %v482
          %484 = vdwg.mxu0
          %485 = vst [vmem:[%s198] sm:$0xff] %v410
          %486 = vst [vmem:[%s198 + $0x8] sm:$0xff] %v412
          %487 = vst [vmem:[%s198 + $0x10] sm:$0xff] %v481
          %488 = vst [vmem:[%s198 + $0x18] sm:$0xff] %v483
        $region40: #{tpu_custom_call.1} parent=27 // pred_fallthru
          _
        %p489 = scmp.eq.s32.totalorder %s25, 2
        // Predicated region
        $region41: #{tpu_custom_call.1} parent=27 // pred_check
          %p490 = pneg %p489
        $region42: #{tpu_custom_call.1} parent=27 // pred_check_branch
          %492 = sbr.rel (%p490) target = $region44
        $region43: #{tpu_custom_call.1} parent=27 // pred_region
          %v493 = vld [vmem:[%s174] sm:$0xff]
          %v494 = vld [vmem:[%s174 + $0x8] sm:$0xff]
          %v495 = vlaneseq
          %v496 = vand.u32 %v495, 127
          %v497 = vadd.s32 %v496, 128
          %s498 = smul.u32 %s25, 256
          %v499 = vstv %s498
          %v500 = vadd.s32 %v499, %v496
          %v501 = vadd.s32 %v499, %v497
          %vm502 = vcmp.lt.s32.totalorder %v500, 600
          %vm503 = vcmp.lt.s32.totalorder %v501, 600
          %v504 = vsel %vm502, %v493, 0.0
          %v505 = vsel %vm503, %v494, 0.0
          %506 = vmatprep.subr.mxu0 %v210
          %507 = vmatpush1.msra.mxu0 %v209
          %508 = vmatprep.subr.mxu0 %v214
          %509 = vmatpush1.msra.mxu0 %v213
          %510 = vmatprep.subr.mxu0 %v218
          %511 = vmatpush1.msra.mxu0 %v217
          %512 = vmatprep.subr.mxu0 %v222
          %513 = vmatpush1.msra.mxu0 %v221
          %514 = vmatprep.subr.mxu0 %v226
          %515 = vmatpush1.msra.mxu0 %v225
          %516 = vmatprep.subr.mxu0 %v230
          %517 = vmatpush1.msra.mxu0 %v229
          %518 = vmatprep.subr.mxu0 %v234
          %519 = vmatpush1.msra.mxu0 %v233
          %520 = vmatprep.subr.mxu0 %v238
          %521 = vmatpush1.msra.mxu0 %v237
          %522 = vmatprep.subr.mxu0 %v242
          %523 = vmatpush1.msra.mxu0 %v241
          %524 = vmatprep.subr.mxu0 %v246
          %525 = vmatpush1.msra.mxu0 %v245
          %526 = vmatprep.subr.mxu0 %v250
          %527 = vmatpush1.msra.mxu0 %v249
          %528 = vmatprep.subr.mxu0 %v254
          %529 = vmatpush1.msra.mxu0 %v253
          %530 = vmatprep.subr.mxu0 %v258
          %531 = vmatpush1.msra.mxu0 %v257
          %532 = vmatprep.subr.mxu0 %v262
          %533 = vmatpush1.msra.mxu0 %v261
          %534 = vmatprep.subr.mxu0 %v266
          %535 = vmatpush1.msra.mxu0 %v265
          %536 = vmatprep.subr.mxu0 %v270
          %537 = vmatpush1.msra.mxu0 %v269
          %538 = vmatprep.subr.mxu0 %v274
          %539 = vmatpush1.msra.mxu0 %v273
          %540 = vmatprep.subr.mxu0 %v278
          %541 = vmatpush1.msra.mxu0 %v277
          %542 = vmatprep.subr.mxu0 %v282
          %543 = vmatpush1.msra.mxu0 %v281
          %544 = vmatprep.subr.mxu0 %v286
          %545 = vmatpush1.msra.mxu0 %v285
          %546 = vmatprep.subr.mxu0 %v290
          %547 = vmatpush1.msra.mxu0 %v289
          %548 = vmatprep.subr.mxu0 %v294
          %549 = vmatpush1.msra.mxu0 %v293
          %550 = vmatprep.subr.mxu0 %v298
          %551 = vmatpush1.msra.mxu0 %v297
          %552 = vmatprep.subr.mxu0 %v302
          %553 = vmatpush1.msra.mxu0 %v301
          %554 = vmatprep.subr.mxu0 %v306
          %555 = vmatpush1.msra.mxu0 %v305
          %556 = vmatprep.subr.mxu0 %v310
          %557 = vmatpush1.msra.mxu0 %v309
          %558 = vmatprep.subr.mxu0 %v314
          %559 = vmatpush1.msra.mxu0 %v313
          %560 = vmatprep.subr.mxu0 %v318
          %561 = vmatpush1.msra.mxu0 %v317
          %562 = vmatprep.subr.mxu0 %v322
          %563 = vmatpush1.msra.mxu0 %v321
          %564 = vmatprep.subr.mxu0 %v326
          %565 = vmatpush1.msra.mxu0 %v325
          %566 = vmatprep.subr.mxu0 %v330
          %567 = vmatpush1.msra.mxu0 %v329
          %568 = vmatprep.subr.mxu0 %v334
          %569 = vmatpush1.msra.mxu0 %v333
          %570 = vmatprep.mubr.f32.mxu0 %v505
          %571 = vmatmul.mubr.f32.gmra.mrb[0].mxu0 %v504
          %v572 = vpop.f32.mrb[0].mxu0
          %v573 = vadd.f32 0.0, %v572
          %v574 = vpop.f32.mrb[0].mxu0
          %v575 = vadd.f32 0.0, %v574
          %576 = vdwg.mxu0
          %577 = vmatprep.subr.mxu0 %v212
          %578 = vmatpush1.msra.mxu0 %v211
          %579 = vmatprep.subr.mxu0 %v216
          %580 = vmatpush1.msra.mxu0 %v215
          %581 = vmatprep.subr.mxu0 %v220
          %582 = vmatpush1.msra.mxu0 %v219
          %583 = vmatprep.subr.mxu0 %v224
          %584 = vmatpush1.msra.mxu0 %v223
          %585 = vmatprep.subr.mxu0 %v228
          %586 = vmatpush1.msra.mxu0 %v227
          %587 = vmatprep.subr.mxu0 %v232
          %588 = vmatpush1.msra.mxu0 %v231
          %589 = vmatprep.subr.mxu0 %v236
          %590 = vmatpush1.msra.mxu0 %v235
          %591 = vmatprep.subr.mxu0 %v240
          %592 = vmatpush1.msra.mxu0 %v239
          %593 = vmatprep.subr.mxu0 %v244
          %594 = vmatpush1.msra.mxu0 %v243
          %595 = vmatprep.subr.mxu0 %v248
          %596 = vmatpush1.msra.mxu0 %v247
          %597 = vmatprep.subr.mxu0 %v252
          %598 = vmatpush1.msra.mxu0 %v251
          %599 = vmatprep.subr.mxu0 %v256
          %600 = vmatpush1.msra.mxu0 %v255
          %601 = vmatprep.subr.mxu0 %v260
          %602 = vmatpush1.msra.mxu0 %v259
          %603 = vmatprep.subr.mxu0 %v264
          %604 = vmatpush1.msra.mxu0 %v263
          %605 = vmatprep.subr.mxu0 %v268
          %606 = vmatpush1.msra.mxu0 %v267
          %607 = vmatprep.subr.mxu0 %v272
          %608 = vmatpush1.msra.mxu0 %v271
          %609 = vmatprep.subr.mxu0 %v276
          %610 = vmatpush1.msra.mxu0 %v275
          %611 = vmatprep.subr.mxu0 %v280
          %612 = vmatpush1.msra.mxu0 %v279
          %613 = vmatprep.subr.mxu0 %v284
          %614 = vmatpush1.msra.mxu0 %v283
          %615 = vmatprep.subr.mxu0 %v288
          %616 = vmatpush1.msra.mxu0 %v287
          %617 = vmatprep.subr.mxu0 %v292
          %618 = vmatpush1.msra.mxu0 %v291
          %619 = vmatprep.subr.mxu0 %v296
          %620 = vmatpush1.msra.mxu0 %v295
          %621 = vmatprep.subr.mxu0 %v300
          %622 = vmatpush1.msra.mxu0 %v299
          %623 = vmatprep.subr.mxu0 %v304
          %624 = vmatpush1.msra.mxu0 %v303
          %625 = vmatprep.subr.mxu0 %v308
          %626 = vmatpush1.msra.mxu0 %v307
          %627 = vmatprep.subr.mxu0 %v312
          %628 = vmatpush1.msra.mxu0 %v311
          %629 = vmatprep.subr.mxu0 %v316
          %630 = vmatpush1.msra.mxu0 %v315
          %631 = vmatprep.subr.mxu0 %v320
          %632 = vmatpush1.msra.mxu0 %v319
          %633 = vmatprep.subr.mxu0 %v324
          %634 = vmatpush1.msra.mxu0 %v323
          %635 = vmatprep.subr.mxu0 %v328
          %636 = vmatpush1.msra.mxu0 %v327
          %637 = vmatprep.subr.mxu0 %v332
          %638 = vmatpush1.msra.mxu0 %v331
          %639 = vmatprep.subr.mxu0 %v336
          %640 = vmatpush1.msra.mxu0 %v335
          %641 = vmatprep.mubr.f32.mxu0 %v505
          %642 = vmatmul.mubr.f32.gmra.mrb[0].mxu0 %v504
          %v643 = vpop.f32.mrb[0].mxu0
          %v644 = vadd.f32 0.0, %v643
          %v645 = vpop.f32.mrb[0].mxu0
          %v646 = vadd.f32 0.0, %v645
          %647 = vdwg.mxu0
          %648 = vst [vmem:[%s198] sm:$0xff] %v573
          %649 = vst [vmem:[%s198 + $0x8] sm:$0xff] %v575
          %650 = vst [vmem:[%s198 + $0x10] sm:$0xff] %v644
          %651 = vst [vmem:[%s198 + $0x18] sm:$0xff] %v646
        $region44: #{tpu_custom_call.1} parent=27 // pred_fallthru
          _
        %s652 = sand.u32 %s91, 1
        %s653 = scalar_lea.sflag [#allocation4], %s652
        %s654 = sand.u32 %s91, 1
        %s655 = smul.addr %s654, 32
        %s656 = scalar_lea.vmem [#allocation7], %s655
        // Predicated region
        $region45: #{tpu_custom_call.1} parent=27 // pred_check
          %p657 = pneg %p101
        $region46: #{tpu_custom_call.1} parent=27 // pred_check_branch
          %659 = sbr.rel (%p657) target = $region48
        $region47: #{tpu_custom_call.1} parent=27 // pred_region
          %s660 = smul.u32 4, %s25
          %s661 = ssub.s32 10, %s660
          %p662 = scmp.lt.s32.totalorder %s661, 4
          %s663 = scalar_select %p662, %s661, 4
          %s664 = smul.u32 128, %s663
          %s666 = ssub.s32 512, %s664
          %667 = vsyncadd %s653, %s666
          %p668 = scmp.ne.s32.totalorder 0, %s664
          %s669 = smul.addr %s24, 10
          %s670 = sadd.s32 %s660, %s669
          %s671 = smul.addr %s670, 128
          %s672 = scalar_lea.hbm %s2, %s671
          %s673 = smul.u32 %s663, 8
          %s674 = sshll.u32 %s673, 4
          %s675 = sshll.u32 %s656, 4
          %s676 = int_to_ptr.vmem [resolvable:$true] %s675
          %678 = dma.vmem_to_hbm [thread:$0]  (%p668), %s676, %s674, %s672, %s653
        $region48: #{tpu_custom_call.1} parent=27 // pred_fallthru
          _
      $region28: #{tpu_custom_call.1} parent=5 // pred_fallthru
        _
      %p679 = scmp.le.s32.totalorder 2, %s15
      // Predicated region
      $region49: #{tpu_custom_call.1} parent=5 // pred_check
        %p680 = pneg %p679
      $region50: #{tpu_custom_call.1} parent=5 // pred_check_branch
        %682 = sbr.rel (%p680) target = $region52
      $region51: #{tpu_custom_call.1} parent=5 // pred_region
        %s683 = ssub.s32 %s15, 2
        // Predicated region
        $region53: #{tpu_custom_call.1} parent=51 // pred_check
          %p684 = pneg %p107
        $region54: #{tpu_custom_call.1} parent=51 // pred_check_branch
          %686 = sbr.rel (%p684) target = $region56
        $region55: #{tpu_custom_call.1} parent=51 // pred_region
          %s687 = sand.u32 %s92, 1
          %s688 = scalar_lea.sflag [#allocation4], %s687
          %s689 = sand.u32 %s92, 1
          %s690 = smul.addr %s689, 32
          %s691 = scalar_lea.vmem [#allocation7], %s690
          %692 = dma.done %s688, 512
        $region56: #{tpu_custom_call.1} parent=51 // pred_fallthru
          _
      $region52: #{tpu_custom_call.1} parent=5 // pred_fallthru
        _
    $region6: #{tpu_custom_call.1} parent=1 // loop_footer
      %s19 = sadd.s32 1, %s15
    $region7: #{tpu_custom_call.1} parent=1 // loop_footer_branch
      %14 = sbr.rel target = $region3
    $region8: #{tpu_custom_call.1} parent=1 // loop_exit
      _
    %693 = vsyncpa [#allocation3], 1
    %s694 = scalar_lea.sflag [#allocation3], 1
    %695 = vsyncpa %s694, 1
    %696 = vsyncpa [#allocation6], 1
    %697 = vsyncpa [#allocation4], 1
    %s698 = scalar_lea.sflag [#allocation4], 1
    %699 = vsyncpa %s698, 1

</llo_original>
